<compile_context>
chip_gen: v5e
topology: v5e:2x2
jax: 0.10.0
libtpu: 0.0.40
codegen_flags: <defaults>
</compile_context>

<pallas_src>
import jax
import jax.numpy as jnp
from jax.experimental import pallas as pl
from jax.experimental.pallas import tpu as pltpu


# ------------------------------ fused kernel --------------------------------

def _dual_module_kernel(bert_ref, ner_ref, hmap_ref, tmap_ref, dish_ref, dist_ref,
                        wl_ref, bl_ref, wq_ref, wc_ref, bc_ref, wo_ref, bo_ref,
                        wb_ref, sel_ref, bb_ref, o_ref):
    f32 = jnp.float32
    bf16 = jnp.bfloat16

    bert = bert_ref[0]                    # [L, Hbert] (gathered BERT output)
    ner = ner_ref[0]                      # [L, ENT]
    hmap = hmap_ref[0]                    # [C, L]
    tmap = tmap_ref[0]                    # [C, L]
    C = hmap.shape[0]

    # ---- Linear projection (MXU, bf16 x bf16 -> f32 accum) + ner concat ----
    proj = jnp.dot(bert.astype(bf16), wl_ref[...].astype(bf16),
                   preferred_element_type=f32) + bl_ref[...]         # [L, HID]
    ctx = jnp.concatenate([proj, ner], axis=-1)                      # [L, HC]
    ctx_b = ctx.astype(bf16)

    # ---- fused h/t mapping matmuls: one [2C, L] @ [L, HC] ------------------
    maps = jnp.concatenate([hmap, tmap], axis=0).astype(bf16)        # [2C, L]
    re_out = jnp.dot(maps, ctx_b, preferred_element_type=f32)        # [2C, HC]
    start_re = re_out[:C]                                            # [C, HC]
    end_re = re_out[C:]                                              # [C, HC]

    # ---- additive cross attention (res_c shared between both calls) -------
    res_c = jnp.dot(ctx_b, wc_ref[...].astype(bf16),
                    preferred_element_type=f32) + bc_ref[...]        # [L, HC]
    wq_b = wq_ref[...].astype(bf16)
    wo = wo_ref[...]                                                 # [1, HC]
    bo = bo_ref[...]                                                 # [1, 1]

    def attend(query, mapping):
        res_q = jnp.dot(query.astype(bf16), wq_b,
                        preferred_element_type=f32)                  # [C, HC]
        # TODO(synk): at production scale tile this [C, L, HC] block over L
        # (online accumulation) to bound VMEM, esp. on v7x (64 MiB).
        tmp = jnp.tanh(res_c[None, :, :] + res_q[:, None, :])        # [C, L, HC]
        logit = jnp.sum(tmp * wo[None, :, :], axis=-1) + bo          # [C, L]
        mask = (mapping > 0.0).astype(f32)
        wexp = mask * jnp.exp(logit)   # matches PyTorch ref: no row-max shift
        weights = wexp / (jnp.sum(wexp, axis=1, keepdims=True) + 1e-5)
        return jnp.dot(weights.astype(bf16), ctx_b,
                       preferred_element_type=f32)                   # [C, HC]

    tail = attend(start_re, tmap)
    head = attend(end_re, hmap)

    # ---- distance concat + vectorized bilinear relation scorer ------------
    s_rep = jnp.concatenate([head, dish_ref[0]], axis=-1)            # [C, V]
    t_rep = jnp.concatenate([tail, dist_ref[0]], axis=-1)            # [C, V]

    R = bb_ref.shape[-1]
    sw = jnp.dot(s_rep.astype(bf16), wb_ref[...].astype(bf16),
                 preferred_element_type=f32)                         # [C, R*V]
    t_tiled = jnp.concatenate([t_rep] * R, axis=-1)                  # [C, R*V]
    # per-relation reduction via 0/1 selection matrix on the MXU
    o_ref[0] = (jnp.dot(sw * t_tiled, sel_ref[...],
                        preferred_element_type=f32) + bb_ref[...])   # [C, R]


def dual_module(bert_gathered, ner_vec, h_mapping, t_mapping, dis_h, dis_t,
                linear_p, att_p, bili_p):
    """One output module: linear -> +ner -> maps -> 2x attention -> +dis -> bilinear."""
    B, L, Hbert = bert_gathered.shape
    ENT = ner_vec.shape[-1]
    C = h_mapping.shape[1]
    DIS = dis_h.shape[-1]
    Wl, bl = linear_p
    HID = Wl.shape[0]
    HC = HID + ENT
    Wb, bb = bili_p
    R, V, _ = Wb.shape

    wl_t = Wl.T                                      # [Hbert, HID]
    wq_t = att_p["wq"].T                             # [HC, HC]
    wc_t = att_p["wc"].T                             # [HC, HC]
    bc = att_p["bc"].reshape(1, HC)
    wo = att_p["wo"].reshape(1, HC)                  # linear_o.weight [1, HC]
    bo = att_p["bo"].reshape(1, 1)
    # column block r of w_mat is W[r]:  s @ w_mat == concat_r(s @ W[r])
    w_mat = jnp.transpose(Wb, (1, 0, 2)).reshape(V, R * V)
    # selection matrix: sums each length-V lane block into one relation column
    sel = (jnp.arange(R * V)[:, None] // V
           == jnp.arange(R)[None, :]).astype(jnp.float32)            # [R*V, R]
    bb2 = bb.reshape(1, R)

    flops = 2 * B * (L * Hbert * HID + 2 * C * L * HC + L * HC * HC
                     + 2 * (C * HC * HC + 3 * C * L * HC)
                     + C * V * R * V + C * R * V)
    transcendentals = 2 * B * (C * L * HC + C * L)
    bytes_accessed = 4 * int(bert_gathered.size + ner_vec.size + h_mapping.size
                             + t_mapping.size + dis_h.size + dis_t.size
                             + wl_t.size + wq_t.size + wc_t.size + w_mat.size
                             + sel.size + B * C * R)

    grid_spec = pltpu.PrefetchScalarGridSpec(
        num_scalar_prefetch=0,
        grid=(B,),
        in_specs=[
            pl.BlockSpec((1, L, Hbert), lambda i: (i, 0, 0)),
            pl.BlockSpec((1, L, ENT), lambda i: (i, 0, 0)),
            pl.BlockSpec((1, C, L), lambda i: (i, 0, 0)),
            pl.BlockSpec((1, C, L), lambda i: (i, 0, 0)),
            pl.BlockSpec((1, C, DIS), lambda i: (i, 0, 0)),
            pl.BlockSpec((1, C, DIS), lambda i: (i, 0, 0)),
            pl.BlockSpec((Hbert, HID), lambda i: (0, 0)),
            pl.BlockSpec((1, HID), lambda i: (0, 0)),
            pl.BlockSpec((HC, HC), lambda i: (0, 0)),
            pl.BlockSpec((HC, HC), lambda i: (0, 0)),
            pl.BlockSpec((1, HC), lambda i: (0, 0)),
            pl.BlockSpec((1, HC), lambda i: (0, 0)),
            pl.BlockSpec((1, 1), lambda i: (0, 0)),
            pl.BlockSpec((V, R * V), lambda i: (0, 0)),
            pl.BlockSpec((R * V, R), lambda i: (0, 0)),
            pl.BlockSpec((1, R), lambda i: (0, 0)),
        ],
        out_specs=pl.BlockSpec((1, C, R), lambda i: (i, 0, 0)),
    )
    return pl.pallas_call(
        _dual_module_kernel,
        out_shape=jax.ShapeDtypeStruct((B, C, R), jnp.float32),
        grid_spec=grid_spec,
        compiler_params=pltpu.CompilerParams(
            dimension_semantics=("parallel",),
            vmem_limit_bytes=64 * 1024 * 1024,
        ),
        cost_estimate=pl.CostEstimate(
            flops=flops, transcendentals=transcendentals,
            bytes_accessed=bytes_accessed),
    )(bert_gathered, ner_vec, h_mapping, t_mapping, dis_h, dis_t,
      wl_t, bl.reshape(1, HID), wq_t, wc_t, bc, wo, bo, w_mat, sel, bb2)


# ------------------------------- Forward glue --------------------------------

def dual_split_forward(params, context_idxs, context_ner, context_starts,
                       h_mapping, t_mapping, dis_h_2_t, dis_t_2_h):
    B, L = context_idxs.shape

    # TODO(synk): pretrained BertModel('bert-base-uncased') has no clean Pallas
    # equivalent here; replaced by a deterministic embedding-lookup stand-in.
    bert_out = params["word_emb"][context_idxs]                        # [B, L, Hbert]

    # context_output = pad_sequence([layer[starts.nonzero()]...], padding=-1)
    # then F.pad(..., value=0) up to L.  Data-dependent gather -> JAX glue.
    nz = context_starts != 0
    counts = nz.sum(axis=1)
    max_k = counts.max()
    order = jnp.argsort(jnp.logical_not(nz).astype(jnp.int32), axis=1, stable=True)
    gathered = jnp.take_along_axis(bert_out, order[:, :, None], axis=1)
    pos = jnp.arange(L)[None, :, None]
    context_output = jnp.where(
        pos < counts[:, None, None], gathered,
        jnp.where(pos < max_k, -1.0, 0.0)).astype(jnp.float32)

    ner_vec = params["ner_emb"][context_ner].astype(jnp.float32)       # [B, L, ENT]
    dis_h = params["dis_emb"][dis_h_2_t].astype(jnp.float32)           # [B, C, DIS]
    dis_t = params["dis_emb"][dis_t_2_h].astype(jnp.float32)           # [B, C, DIS]

    outputs = []
    for o in range(params["num_output_module"]):
        outputs.append(
            dual_module(context_output, ner_vec, h_mapping, t_mapping,
                        dis_h, dis_t,
                        params["linear"][o], params["attention"][o],
                        params["bili"][o]))                            # [B, C, R]
    return outputs


# ---------------------------------- main -------------------------------------

if __name__ == "__main__":
    key = jax.random.PRNGKey(0)
    B, L, C = 2, 16, 8
    HBERT, HID, ENT, DIS, R, VOCAB = 64, 32, 8, 8, 12, 50
    HC = HID + ENT          # context_hidden_size = hidden + entity_type_size
    V = HC + DIS            # vect_size = context_hidden_size + dis_size
    NUM_OUT = 2             # num_output_module, twin_init=True, cross_encoder=True

    ks = jax.random.split(key, 24)

    word_emb = jax.random.normal(ks[0], (VOCAB, HBERT), jnp.float32) * 0.1
    ner_emb = jax.random.normal(ks[1], (7, ENT), jnp.float32) * 0.1
    ner_emb = ner_emb.at[0].set(0.0)           # padding_idx=0
    dis_emb = jax.random.normal(ks[2], (20, DIS), jnp.float32) * 0.1
    dis_emb = dis_emb.at[10].set(0.0)          # padding_idx=10

    linear_params = [
        (jax.random.normal(ks[3 + o], (HID, HBERT), jnp.float32) * 0.05,
         jax.random.normal(ks[5 + o], (HID,), jnp.float32) * 0.05)
        for o in range(NUM_OUT)
    ]
    # twin_init=True -> attention / bilinear params of module 1 copied from module 0
    att0 = dict(
        wc=jax.random.normal(ks[7], (HC, HC), jnp.float32) * 0.05,
        bc=jax.random.normal(ks[8], (HC,), jnp.float32) * 0.05,
        wq=jax.random.normal(ks[9], (HC, HC), jnp.float32) * 0.05,
        wo=jax.random.normal(ks[10], (1, HC), jnp.float32) * 0.05,
        bo=jax.random.normal(ks[11], (1,), jnp.float32) * 0.05,
    )
    bili0 = (jax.random.normal(ks[12], (R, V, V), jnp.float32) * 0.05,
             jax.random.normal(ks[13], (R,), jnp.float32) * 0.05)

    params = dict(
        word_emb=word_emb, ner_emb=ner_emb, dis_emb=dis_emb,
        linear=linear_params, attention=[att0, att0], bili=[bili0, bili0],
        num_output_module=NUM_OUT,
    )

    context_idxs = jax.random.randint(ks[14], (B, L), 1, VOCAB)
    context_ner = jax.random.randint(ks[15], (B, L), 0, 7)
    context_starts = (jax.random.uniform(ks[16], (B, L)) > 0.5).astype(jnp.int32)
    context_starts = context_starts.at[:, 0].set(1)    # ensure >=1 start per example
    h_mapping = (jax.random.uniform(ks[17], (B, C, L)) *
                 (jax.random.uniform(ks[18], (B, C, L)) > 0.4)).astype(jnp.float32)
    t_mapping = (jax.random.uniform(ks[19], (B, C, L)) *
                 (jax.random.uniform(ks[20], (B, C, L)) > 0.4)).astype(jnp.float32)
    dis_h_2_t = jax.random.randint(ks[21], (B, C), 0, 20)
    dis_t_2_h = jax.random.randint(ks[22], (B, C), 0, 20)

    outs = dual_split_forward(params, context_idxs, context_ner, context_starts,
                              h_mapping, t_mapping, dis_h_2_t, dis_t_2_h)
    for out in outs:
        jax.block_until_ready(out)
    assert len(outs) == NUM_OUT
    assert outs[0].shape == (B, C, R) and outs[1].shape == (B, C, R)
    assert all(bool(jnp.all(jnp.isfinite(o))) for o in outs)
    print("KERNEL_OK")
</pallas_src>

<mosaic_0001>
module attributes {stable_mosaic.version = 11 : i64} {
  func.func @_dual_module_kernel(%arg0: i32, %arg1: memref<1x16x64xf32, #tpu.memory_space<vmem>>, %arg2: memref<1x16x8xf32, #tpu.memory_space<vmem>>, %arg3: memref<1x8x16xf32, #tpu.memory_space<vmem>>, %arg4: memref<1x8x16xf32, #tpu.memory_space<vmem>>, %arg5: memref<1x8x8xf32, #tpu.memory_space<vmem>>, %arg6: memref<1x8x8xf32, #tpu.memory_space<vmem>>, %arg7: memref<64x32xf32, #tpu.memory_space<vmem>>, %arg8: memref<1x32xf32, #tpu.memory_space<vmem>>, %arg9: memref<40x40xf32, #tpu.memory_space<vmem>>, %arg10: memref<40x40xf32, #tpu.memory_space<vmem>>, %arg11: memref<1x40xf32, #tpu.memory_space<vmem>>, %arg12: memref<1x40xf32, #tpu.memory_space<vmem>>, %arg13: memref<1x1xf32, #tpu.memory_space<vmem>>, %arg14: memref<48x576xf32, #tpu.memory_space<vmem>>, %arg15: memref<576x12xf32, #tpu.memory_space<vmem>>, %arg16: memref<1x12xf32, #tpu.memory_space<vmem>>, %arg17: memref<1x8x12xf32, #tpu.memory_space<vmem>>) attributes {dimension_semantics = [#tpu.dimension_semantics<parallel>], iteration_bounds = array<i64: 2>, scalar_prefetch = 0 : i64, scratch_operands = 0 : i64, tpu.core_type = #tpu.core_type<tc>, window_params = [{transform_indices = @transform_0, window_bounds = array<i64: 1, 16, 64>}, {transform_indices = @transform_1, window_bounds = array<i64: 1, 16, 8>}, {transform_indices = @transform_2, window_bounds = array<i64: 1, 8, 16>}, {transform_indices = @transform_3, window_bounds = array<i64: 1, 8, 16>}, {transform_indices = @transform_4, window_bounds = array<i64: 1, 8, 8>}, {transform_indices = @transform_5, window_bounds = array<i64: 1, 8, 8>}, {pipeline_mode = #tpu.pipeline_mode<synchronous>, transform_indices = @transform_6, window_bounds = array<i64: 64, 32>}, {pipeline_mode = #tpu.pipeline_mode<synchronous>, transform_indices = @transform_7, window_bounds = array<i64: 1, 32>}, {pipeline_mode = #tpu.pipeline_mode<synchronous>, transform_indices = @transform_8, window_bounds = array<i64: 40, 40>}, {pipeline_mode = #tpu.pipeline_mode<synchronous>, transform_indices = @transform_9, window_bounds = array<i64: 40, 40>}, {pipeline_mode = #tpu.pipeline_mode<synchronous>, transform_indices = @transform_10, window_bounds = array<i64: 1, 40>}, {pipeline_mode = #tpu.pipeline_mode<synchronous>, transform_indices = @transform_11, window_bounds = array<i64: 1, 40>}, {pipeline_mode = #tpu.pipeline_mode<synchronous>, transform_indices = @transform_12, window_bounds = array<i64: 1, 1>}, {pipeline_mode = #tpu.pipeline_mode<synchronous>, transform_indices = @transform_13, window_bounds = array<i64: 48, 576>}, {pipeline_mode = #tpu.pipeline_mode<synchronous>, transform_indices = @transform_14, window_bounds = array<i64: 576, 12>}, {pipeline_mode = #tpu.pipeline_mode<synchronous>, transform_indices = @transform_15, window_bounds = array<i64: 1, 12>}, {transform_indices = @transform_16, window_bounds = array<i64: 1, 8, 12>}]} {
    %c0 = arith.constant 0 : index
    %c0_0 = arith.constant 0 : index
    %c0_1 = arith.constant 0 : index
    %0 = vector.load %arg1[%c0, %c0_0, %c0_1] : memref<1x16x64xf32, #tpu.memory_space<vmem>>, vector<1x16x64xf32>
    %1 = vector.shape_cast %0 : vector<1x16x64xf32> to vector<16x64xf32>
    %c0_2 = arith.constant 0 : index
    %c0_3 = arith.constant 0 : index
    %c0_4 = arith.constant 0 : index
    %2 = vector.load %arg2[%c0_2, %c0_3, %c0_4] : memref<1x16x8xf32, #tpu.memory_space<vmem>>, vector<1x16x8xf32>
    %3 = vector.shape_cast %2 : vector<1x16x8xf32> to vector<16x8xf32>
    %c0_5 = arith.constant 0 : index
    %c0_6 = arith.constant 0 : index
    %c0_7 = arith.constant 0 : index
    %4 = vector.load %arg3[%c0_5, %c0_6, %c0_7] : memref<1x8x16xf32, #tpu.memory_space<vmem>>, vector<1x8x16xf32>
    %5 = vector.shape_cast %4 : vector<1x8x16xf32> to vector<8x16xf32>
    %c0_8 = arith.constant 0 : index
    %c0_9 = arith.constant 0 : index
    %c0_10 = arith.constant 0 : index
    %6 = vector.load %arg4[%c0_8, %c0_9, %c0_10] : memref<1x8x16xf32, #tpu.memory_space<vmem>>, vector<1x8x16xf32>
    %7 = vector.shape_cast %6 : vector<1x8x16xf32> to vector<8x16xf32>
    %8 = arith.truncf %1 : vector<16x64xf32> to vector<16x64xbf16>
    %c0_11 = arith.constant 0 : index
    %c0_12 = arith.constant 0 : index
    %9 = vector.load %arg7[%c0_11, %c0_12] : memref<64x32xf32, #tpu.memory_space<vmem>>, vector<64x32xf32>
    %10 = arith.truncf %9 : vector<64x32xf32> to vector<64x32xbf16>
    %cst = arith.constant dense<0.000000e+00> : vector<16x32xf32>
    %11 = tpu.matmul %8, %10, %cst {dimension_numbers = #tpu.dot_dimension_numbers<[1], [0], [0], [1], [0, 0, 1, 1], [], []>} : vector<16x64xbf16>, vector<64x32xbf16>, vector<16x32xf32> -> vector<16x32xf32>
    %c0_13 = arith.constant 0 : index
    %c0_14 = arith.constant 0 : index
    %12 = vector.load %arg8[%c0_13, %c0_14] : memref<1x32xf32, #tpu.memory_space<vmem>>, vector<1x32xf32>
    %13 = vector.broadcast %12 : vector<1x32xf32> to vector<16x32xf32>
    %14 = arith.addf %11, %13 : vector<16x32xf32>
    %15 = tpu.concatenate %14, %3 in 1 : vector<16x32xf32>, vector<16x8xf32> -> vector<16x40xf32>
    %16 = arith.truncf %15 : vector<16x40xf32> to vector<16x40xbf16>
    %17 = tpu.concatenate %5, %7 in 0 : vector<8x16xf32>, vector<8x16xf32> -> vector<16x16xf32>
    %18 = arith.truncf %17 : vector<16x16xf32> to vector<16x16xbf16>
    %cst_15 = arith.constant dense<0.000000e+00> : vector<16x40xf32>
    %19 = tpu.matmul %18, %16, %cst_15 {dimension_numbers = #tpu.dot_dimension_numbers<[1], [0], [0], [1], [0, 0, 1, 1], [], []>} : vector<16x16xbf16>, vector<16x40xbf16>, vector<16x40xf32> -> vector<16x40xf32>
    %20 = vector.extract_strided_slice %19 {offsets = [0, 0], sizes = [8, 40], strides = [1, 1]} : vector<16x40xf32> to vector<8x40xf32>
    %21 = vector.extract_strided_slice %19 {offsets = [8, 0], sizes = [8, 40], strides = [1, 1]} : vector<16x40xf32> to vector<8x40xf32>
    %c0_16 = arith.constant 0 : index
    %c0_17 = arith.constant 0 : index
    %22 = vector.load %arg10[%c0_16, %c0_17] : memref<40x40xf32, #tpu.memory_space<vmem>>, vector<40x40xf32>
    %23 = arith.truncf %22 : vector<40x40xf32> to vector<40x40xbf16>
    %cst_18 = arith.constant dense<0.000000e+00> : vector<16x40xf32>
    %24 = tpu.matmul %16, %23, %cst_18 {dimension_numbers = #tpu.dot_dimension_numbers<[1], [0], [0], [1], [0, 0, 1, 1], [], []>} : vector<16x40xbf16>, vector<40x40xbf16>, vector<16x40xf32> -> vector<16x40xf32>
    %c0_19 = arith.constant 0 : index
    %c0_20 = arith.constant 0 : index
    %25 = vector.load %arg11[%c0_19, %c0_20] : memref<1x40xf32, #tpu.memory_space<vmem>>, vector<1x40xf32>
    %26 = vector.broadcast %25 : vector<1x40xf32> to vector<16x40xf32>
    %27 = arith.addf %24, %26 : vector<16x40xf32>
    %c0_21 = arith.constant 0 : index
    %c0_22 = arith.constant 0 : index
    %28 = vector.load %arg9[%c0_21, %c0_22] : memref<40x40xf32, #tpu.memory_space<vmem>>, vector<40x40xf32>
    %29 = arith.truncf %28 : vector<40x40xf32> to vector<40x40xbf16>
    %c0_23 = arith.constant 0 : index
    %c0_24 = arith.constant 0 : index
    %30 = vector.load %arg12[%c0_23, %c0_24] : memref<1x40xf32, #tpu.memory_space<vmem>>, vector<1x40xf32>
    %c0_25 = arith.constant 0 : index
    %c0_26 = arith.constant 0 : index
    %31 = vector.load %arg13[%c0_25, %c0_26] : memref<1x1xf32, #tpu.memory_space<vmem>>, vector<1x1xf32>
    %32 = arith.truncf %20 : vector<8x40xf32> to vector<8x40xbf16>
    %cst_27 = arith.constant dense<0.000000e+00> : vector<8x40xf32>
    %33 = tpu.matmul %32, %29, %cst_27 {dimension_numbers = #tpu.dot_dimension_numbers<[1], [0], [0], [1], [0, 0, 1, 1], [], []>} : vector<8x40xbf16>, vector<40x40xbf16>, vector<8x40xf32> -> vector<8x40xf32>
    %34 = vector.shape_cast %27 : vector<16x40xf32> to vector<1x16x40xf32>
    %35 = vector.shape_cast %33 : vector<8x40xf32> to vector<8x1x40xf32>
    %36 = vector.broadcast %34 : vector<1x16x40xf32> to vector<8x16x40xf32>
    %37 = vector.broadcast %35 : vector<8x1x40xf32> to vector<8x16x40xf32>
    %38 = arith.addf %36, %37 : vector<8x16x40xf32>
    %39 = math.tanh %38 : vector<8x16x40xf32>
    %40 = vector.shape_cast %30 : vector<1x40xf32> to vector<1x1x40xf32>
    %41 = vector.broadcast %40 : vector<1x1x40xf32> to vector<8x16x40xf32>
    %42 = arith.mulf %39, %41 : vector<8x16x40xf32>
    %cst_28 = arith.constant dense<0.000000e+00> : vector<8x16xf32>
    %43 = vector.multi_reduction <add>, %42, %cst_28 [2] : vector<8x16x40xf32> to vector<8x16xf32>
    %44 = vector.broadcast %31 : vector<1x1xf32> to vector<8x16xf32>
    %45 = arith.addf %43, %44 : vector<8x16xf32>
    %cst_29 = arith.constant 0.000000e+00 : f32
    %46 = vector.broadcast %cst_29 : f32 to vector<8x16xf32>
    %47 = arith.cmpf ogt, %7, %46 : vector<8x16xf32>
    %48 = arith.extui %47 : vector<8x16xi1> to vector<8x16xi32>
    %49 = arith.sitofp %48 : vector<8x16xi32> to vector<8x16xf32>
    %50 = math.exp %45 : vector<8x16xf32>
    %51 = arith.mulf %49, %50 : vector<8x16xf32>
    %cst_30 = arith.constant dense<0.000000e+00> : vector<8xf32>
    %52 = vector.multi_reduction <add>, %51, %cst_30 [1] : vector<8x16xf32> to vector<8xf32>
    %53 = vector.shape_cast %52 : vector<8xf32> to vector<8x1xf32>
    %cst_31 = arith.constant 9.99999974E-6 : f32
    %54 = vector.broadcast %cst_31 : f32 to vector<8x1xf32>
    %55 = arith.addf %53, %54 : vector<8x1xf32>
    %56 = vector.broadcast %55 : vector<8x1xf32> to vector<8x16xf32>
    %57 = arith.divf %51, %56 : vector<8x16xf32>
    %58 = arith.truncf %57 : vector<8x16xf32> to vector<8x16xbf16>
    %cst_32 = arith.constant dense<0.000000e+00> : vector<8x40xf32>
    %59 = tpu.matmul %58, %16, %cst_32 {dimension_numbers = #tpu.dot_dimension_numbers<[1], [0], [0], [1], [0, 0, 1, 1], [], []>} : vector<8x16xbf16>, vector<16x40xbf16>, vector<8x40xf32> -> vector<8x40xf32>
    %60 = arith.truncf %21 : vector<8x40xf32> to vector<8x40xbf16>
    %cst_33 = arith.constant dense<0.000000e+00> : vector<8x40xf32>
    %61 = tpu.matmul %60, %29, %cst_33 {dimension_numbers = #tpu.dot_dimension_numbers<[1], [0], [0], [1], [0, 0, 1, 1], [], []>} : vector<8x40xbf16>, vector<40x40xbf16>, vector<8x40xf32> -> vector<8x40xf32>
    %62 = vector.shape_cast %27 : vector<16x40xf32> to vector<1x16x40xf32>
    %63 = vector.shape_cast %61 : vector<8x40xf32> to vector<8x1x40xf32>
    %64 = vector.broadcast %62 : vector<1x16x40xf32> to vector<8x16x40xf32>
    %65 = vector.broadcast %63 : vector<8x1x40xf32> to vector<8x16x40xf32>
    %66 = arith.addf %64, %65 : vector<8x16x40xf32>
    %67 = math.tanh %66 : vector<8x16x40xf32>
    %68 = vector.shape_cast %30 : vector<1x40xf32> to vector<1x1x40xf32>
    %69 = vector.broadcast %68 : vector<1x1x40xf32> to vector<8x16x40xf32>
    %70 = arith.mulf %67, %69 : vector<8x16x40xf32>
    %cst_34 = arith.constant dense<0.000000e+00> : vector<8x16xf32>
    %71 = vector.multi_reduction <add>, %70, %cst_34 [2] : vector<8x16x40xf32> to vector<8x16xf32>
    %72 = vector.broadcast %31 : vector<1x1xf32> to vector<8x16xf32>
    %73 = arith.addf %71, %72 : vector<8x16xf32>
    %cst_35 = arith.constant 0.000000e+00 : f32
    %74 = vector.broadcast %cst_35 : f32 to vector<8x16xf32>
    %75 = arith.cmpf ogt, %5, %74 : vector<8x16xf32>
    %76 = arith.extui %75 : vector<8x16xi1> to vector<8x16xi32>
    %77 = arith.sitofp %76 : vector<8x16xi32> to vector<8x16xf32>
    %78 = math.exp %73 : vector<8x16xf32>
    %79 = arith.mulf %77, %78 : vector<8x16xf32>
    %cst_36 = arith.constant dense<0.000000e+00> : vector<8xf32>
    %80 = vector.multi_reduction <add>, %79, %cst_36 [1] : vector<8x16xf32> to vector<8xf32>
    %81 = vector.shape_cast %80 : vector<8xf32> to vector<8x1xf32>
    %cst_37 = arith.constant 9.99999974E-6 : f32
    %82 = vector.broadcast %cst_37 : f32 to vector<8x1xf32>
    %83 = arith.addf %81, %82 : vector<8x1xf32>
    %84 = vector.broadcast %83 : vector<8x1xf32> to vector<8x16xf32>
    %85 = arith.divf %79, %84 : vector<8x16xf32>
    %86 = arith.truncf %85 : vector<8x16xf32> to vector<8x16xbf16>
    %cst_38 = arith.constant dense<0.000000e+00> : vector<8x40xf32>
    %87 = tpu.matmul %86, %16, %cst_38 {dimension_numbers = #tpu.dot_dimension_numbers<[1], [0], [0], [1], [0, 0, 1, 1], [], []>} : vector<8x16xbf16>, vector<16x40xbf16>, vector<8x40xf32> -> vector<8x40xf32>
    %c0_39 = arith.constant 0 : index
    %c0_40 = arith.constant 0 : index
    %c0_41 = arith.constant 0 : index
    %88 = vector.load %arg5[%c0_39, %c0_40, %c0_41] : memref<1x8x8xf32, #tpu.memory_space<vmem>>, vector<1x8x8xf32>
    %89 = vector.shape_cast %88 : vector<1x8x8xf32> to vector<8x8xf32>
    %90 = tpu.concatenate %87, %89 in 1 : vector<8x40xf32>, vector<8x8xf32> -> vector<8x48xf32>
    %c0_42 = arith.constant 0 : index
    %c0_43 = arith.constant 0 : index
    %c0_44 = arith.constant 0 : index
    %91 = vector.load %arg6[%c0_42, %c0_43, %c0_44] : memref<1x8x8xf32, #tpu.memory_space<vmem>>, vector<1x8x8xf32>
    %92 = vector.shape_cast %91 : vector<1x8x8xf32> to vector<8x8xf32>
    %93 = tpu.concatenate %59, %92 in 1 : vector<8x40xf32>, vector<8x8xf32> -> vector<8x48xf32>
    %94 = arith.truncf %90 : vector<8x48xf32> to vector<8x48xbf16>
    %c0_45 = arith.constant 0 : index
    %c0_46 = arith.constant 0 : index
    %95 = vector.load %arg14[%c0_45, %c0_46] : memref<48x576xf32, #tpu.memory_space<vmem>>, vector<48x576xf32>
    %96 = arith.truncf %95 : vector<48x576xf32> to vector<48x576xbf16>
    %cst_47 = arith.constant dense<0.000000e+00> : vector<8x576xf32>
    %97 = tpu.matmul %94, %96, %cst_47 {dimension_numbers = #tpu.dot_dimension_numbers<[1], [0], [0], [1], [0, 0, 1, 1], [], []>} : vector<8x48xbf16>, vector<48x576xbf16>, vector<8x576xf32> -> vector<8x576xf32>
    %98 = tpu.concatenate %93, %93, %93, %93, %93, %93, %93, %93, %93, %93, %93, %93 in 1 : vector<8x48xf32>, vector<8x48xf32>, vector<8x48xf32>, vector<8x48xf32>, vector<8x48xf32>, vector<8x48xf32>, vector<8x48xf32>, vector<8x48xf32>, vector<8x48xf32>, vector<8x48xf32>, vector<8x48xf32>, vector<8x48xf32> -> vector<8x576xf32>
    %99 = arith.mulf %97, %98 : vector<8x576xf32>
    %c0_48 = arith.constant 0 : index
    %c0_49 = arith.constant 0 : index
    %100 = vector.load %arg15[%c0_48, %c0_49] : memref<576x12xf32, #tpu.memory_space<vmem>>, vector<576x12xf32>
    %cst_50 = arith.constant dense<0.000000e+00> : vector<8x12xf32>
    %101 = tpu.matmul %99, %100, %cst_50 {dimension_numbers = #tpu.dot_dimension_numbers<[1], [0], [0], [1], [0, 0, 1, 1], [], []>} : vector<8x576xf32>, vector<576x12xf32>, vector<8x12xf32> -> vector<8x12xf32>
    %c0_51 = arith.constant 0 : index
    %c0_52 = arith.constant 0 : index
    %102 = vector.load %arg16[%c0_51, %c0_52] : memref<1x12xf32, #tpu.memory_space<vmem>>, vector<1x12xf32>
    %103 = vector.broadcast %102 : vector<1x12xf32> to vector<8x12xf32>
    %104 = arith.addf %101, %103 : vector<8x12xf32>
    %c0_53 = arith.constant 0 : index
    %c0_54 = arith.constant 0 : index
    %c0_55 = arith.constant 0 : index
    %105 = vector.load %arg17[%c0_53, %c0_54, %c0_55] : memref<1x8x12xf32, #tpu.memory_space<vmem>>, vector<1x8x12xf32>
    %106 = vector.shape_cast %105 : vector<1x8x12xf32> to vector<8x12xf32>
    %107 = vector.shape_cast %104 : vector<8x12xf32> to vector<1x8x12xf32>
    tpu.vector_store %arg17[%c0_53, %c0_54, %c0_55], %107 {strides = array<i32>} : memref<1x8x12xf32, #tpu.memory_space<vmem>>, vector<1x8x12xf32>,
    return
  }
  func.func @transform_0(%arg0: i32) -> (i32, i32, i32) {
    %c0_i32 = arith.constant 0 : i32
    %c0_i32_0 = arith.constant 0 : i32
    %c0_i32_1 = arith.constant 0 : i32
    return %arg0, %c0_i32, %c0_i32_0 : i32, i32, i32
  }
  func.func @transform_1(%arg0: i32) -> (i32, i32, i32) {
    %c0_i32 = arith.constant 0 : i32
    %c0_i32_0 = arith.constant 0 : i32
    %c0_i32_1 = arith.constant 0 : i32
    return %arg0, %c0_i32, %c0_i32_0 : i32, i32, i32
  }
  func.func @transform_2(%arg0: i32) -> (i32, i32, i32) {
    %c0_i32 = arith.constant 0 : i32
    %c0_i32_0 = arith.constant 0 : i32
    %c0_i32_1 = arith.constant 0 : i32
    return %arg0, %c0_i32, %c0_i32_0 : i32, i32, i32
  }
  func.func @transform_3(%arg0: i32) -> (i32, i32, i32) {
    %c0_i32 = arith.constant 0 : i32
    %c0_i32_0 = arith.constant 0 : i32
    %c0_i32_1 = arith.constant 0 : i32
    return %arg0, %c0_i32, %c0_i32_0 : i32, i32, i32
  }
  func.func @transform_4(%arg0: i32) -> (i32, i32, i32) {
    %c0_i32 = arith.constant 0 : i32
    %c0_i32_0 = arith.constant 0 : i32
    %c0_i32_1 = arith.constant 0 : i32
    return %arg0, %c0_i32, %c0_i32_0 : i32, i32, i32
  }
  func.func @transform_5(%arg0: i32) -> (i32, i32, i32) {
    %c0_i32 = arith.constant 0 : i32
    %c0_i32_0 = arith.constant 0 : i32
    %c0_i32_1 = arith.constant 0 : i32
    return %arg0, %c0_i32, %c0_i32_0 : i32, i32, i32
  }
  func.func @transform_6(%arg0: i32) -> (i32, i32) {
    %c0_i32 = arith.constant 0 : i32
    %c0_i32_0 = arith.constant 0 : i32
    %c0_i32_1 = arith.constant 0 : i32
    return %c0_i32, %c0_i32_0 : i32, i32
  }
  func.func @transform_7(%arg0: i32) -> (i32, i32) {
    %c0_i32 = arith.constant 0 : i32
    %c0_i32_0 = arith.constant 0 : i32
    %c0_i32_1 = arith.constant 0 : i32
    return %c0_i32, %c0_i32_0 : i32, i32
  }
  func.func @transform_8(%arg0: i32) -> (i32, i32) {
    %c0_i32 = arith.constant 0 : i32
    %c0_i32_0 = arith.constant 0 : i32
    %c0_i32_1 = arith.constant 0 : i32
    return %c0_i32, %c0_i32_0 : i32, i32
  }
  func.func @transform_9(%arg0: i32) -> (i32, i32) {
    %c0_i32 = arith.constant 0 : i32
    %c0_i32_0 = arith.constant 0 : i32
    %c0_i32_1 = arith.constant 0 : i32
    return %c0_i32, %c0_i32_0 : i32, i32
  }
  func.func @transform_10(%arg0: i32) -> (i32, i32) {
    %c0_i32 = arith.constant 0 : i32
    %c0_i32_0 = arith.constant 0 : i32
    %c0_i32_1 = arith.constant 0 : i32
    return %c0_i32, %c0_i32_0 : i32, i32
  }
  func.func @transform_11(%arg0: i32) -> (i32, i32) {
    %c0_i32 = arith.constant 0 : i32
    %c0_i32_0 = arith.constant 0 : i32
    %c0_i32_1 = arith.constant 0 : i32
    return %c0_i32, %c0_i32_0 : i32, i32
  }
  func.func @transform_12(%arg0: i32) -> (i32, i32) {
    %c0_i32 = arith.constant 0 : i32
    %c0_i32_0 = arith.constant 0 : i32
    %c0_i32_1 = arith.constant 0 : i32
    return %c0_i32, %c0_i32_0 : i32, i32
  }
  func.func @transform_13(%arg0: i32) -> (i32, i32) {
    %c0_i32 = arith.constant 0 : i32
    %c0_i32_0 = arith.constant 0 : i32
    %c0_i32_1 = arith.constant 0 : i32
    return %c0_i32, %c0_i32_0 : i32, i32
  }
  func.func @transform_14(%arg0: i32) -> (i32, i32) {
    %c0_i32 = arith.constant 0 : i32
    %c0_i32_0 = arith.constant 0 : i32
    %c0_i32_1 = arith.constant 0 : i32
    return %c0_i32, %c0_i32_0 : i32, i32
  }
  func.func @transform_15(%arg0: i32) -> (i32, i32) {
    %c0_i32 = arith.constant 0 : i32
    %c0_i32_0 = arith.constant 0 : i32
    %c0_i32_1 = arith.constant 0 : i32
    return %c0_i32, %c0_i32_0 : i32, i32
  }
  func.func @transform_16(%arg0: i32) -> (i32, i32, i32) {
    %c0_i32 = arith.constant 0 : i32
    %c0_i32_0 = arith.constant 0 : i32
    %c0_i32_1 = arith.constant 0 : i32
    return %arg0, %c0_i32, %c0_i32_0 : i32, i32, i32
  }
}

</mosaic_0001>

<llo_original>
// kernel: tpu_custom_call.1
$region0: #{tpu_custom_call.1}
  #allocation0 [shape = 'u32[]', space=smem, size = 0x4, offset = 0x4, fixed_abs, tag = 'smem constant byte address 0x4 - core index']
  #allocation1 [shape = 'u32[72,128]{1,0:T(1,128)}', space=vmem, size = 0x9000, scoped, tag = 'internal scratch']
  #allocation2 [shape = 'f32[1,1]{1,0:T(1,128)S(1)}', space=vmem, size = 0x200, scoped, tag = 'scoped memory for tpu_custom_call.1']
  %s0 = inlined_call_operand.vmem [shape: f32[2,16,64], index: 0, kind: input, shape index: {}]
  %s1 = inlined_call_operand.vmem [shape: f32[2,16,8], index: 1, kind: input, shape index: {}]
  %s2 = inlined_call_operand.vmem [shape: f32[2,8,16], index: 2, kind: input, shape index: {}]
  %s3 = inlined_call_operand.vmem [shape: f32[2,8,16], index: 3, kind: input, shape index: {}]
  %s4 = inlined_call_operand.vmem [shape: f32[2,8,8], index: 4, kind: input, shape index: {}]
  %s5 = inlined_call_operand.vmem [shape: f32[2,8,8], index: 5, kind: input, shape index: {}]
  %s6 = inlined_call_operand.vmem [shape: f32[64,32], index: 6, kind: input, shape index: {}]
  %s7 = inlined_call_operand.vmem [shape: f32[1,32], index: 7, kind: input, shape index: {}]
  %s8 = inlined_call_operand.vmem [shape: f32[40,40], index: 8, kind: input, shape index: {}]
  %s9 = inlined_call_operand.vmem [shape: f32[40,40], index: 9, kind: input, shape index: {}]
  %s10 = inlined_call_operand.vmem [shape: f32[1,40], index: 10, kind: input, shape index: {}]
  %s11 = inlined_call_operand.vmem [shape: f32[1,40], index: 11, kind: input, shape index: {}]
  %s12 = inlined_call_operand.<no memory space> [shape: f32[1,1], index: 12, kind: input, shape index: {}]
  %s13 = inlined_call_operand.vmem [shape: f32[48,576], index: 13, kind: input, shape index: {}]
  %s14 = inlined_call_operand.vmem [shape: f32[576,12], index: 14, kind: input, shape index: {}]
  %s15 = inlined_call_operand.vmem [shape: f32[1,12], index: 15, kind: input, shape index: {}]
  %s16 = inlined_call_operand.hbm [shape: f32[2,8,12], index: 16, kind: output, shape index: {}]
  %s17 = sld [smem:[#allocation0]]
  $region97: #{tpu_custom_call.1} parent=0
    _
  %s19 = ssub.s32 1, %s17
  %s20 = scalar_select 0, %s19, %s17
  %v21 = vstv %s12
  %22 = vst [vmem:[#allocation2] sm:$0x1] %v21
  $region1: #{tpu_custom_call.1} parent=0
    #allocation3 [shape = 'u8[8192]{0}', space=vmem, size = 0x2000, scoped, tag = 'output window, operand 0']
    #allocation4 [shape = 's32[2]{0}', space=sflag, size = 0x8, scoped, tag = 'scoped memory for tpu_custom_call.1']
    %23 = vsyncpa [#allocation4], 0
    %s24 = scalar_lea.sflag [#allocation4], 1
    %25 = vsyncpa %s24, 0
    loop: start=0, step=1, limit=4
    $region2: #{tpu_custom_call.1} parent=1 // loop_pre_header
      _
    $region3: #{tpu_custom_call.1} parent=1 // loop_header
      %s27 = sphi 0, %s31
      %p28 = scmp.ge.s32.totalorder %s27, 4
      %s37 = sphi 0, %s39
      %s40 = sphi 0, %s37
      %s41 = sphi 0, %s40
      %s57 = sphi 0, %s41
      %s63 = sphi 0, %s65
      %s66 = sphi 0, %s63
      %s67 = sphi 0, %s66
      %s83 = sphi 0, %s67
      %s89 = sphi 0, %s91
      %s92 = sphi 0, %s89
      %s93 = sphi 0, %s92
      %s109 = sphi 0, %s93
      %s115 = sphi 0, %s117
      %s118 = sphi 0, %s115
      %s119 = sphi 0, %s118
      %s135 = sphi 0, %s119
      %s141 = sphi 0, %s143
      %s144 = sphi 0, %s141
      %s145 = sphi 0, %s144
      %s161 = sphi 0, %s145
      %s167 = sphi 0, %s169
      %s170 = sphi 0, %s167
      %s171 = sphi 0, %s170
      %s187 = sphi 0, %s171
      %s191 = sphi 0, %s191
      %s193 = sphi 0, %s191
      %s194 = sphi 0, %s193
      %s208 = sphi 0, %s194
      %s212 = sphi 0, %s212
      %s214 = sphi 0, %s212
      %s215 = sphi 0, %s214
      %s229 = sphi 0, %s215
      %s233 = sphi 0, %s233
      %s235 = sphi 0, %s233
      %s236 = sphi 0, %s235
      %s250 = sphi 0, %s236
      %s254 = sphi 0, %s254
      %s256 = sphi 0, %s254
      %s257 = sphi 0, %s256
      %s271 = sphi 0, %s257
      %s275 = sphi 0, %s275
      %s277 = sphi 0, %s275
      %s278 = sphi 0, %s277
      %s292 = sphi 0, %s278
      %s296 = sphi 0, %s296
      %s298 = sphi 0, %s296
      %s299 = sphi 0, %s298
      %s313 = sphi 0, %s299
      %s317 = sphi 0, %s317
      %s319 = sphi 0, %s317
      %s320 = sphi 0, %s319
      %s334 = sphi 0, %s320
      %s338 = sphi 0, %s338
      %s340 = sphi 0, %s338
      %s341 = sphi 0, %s340
      %s355 = sphi 0, %s341
      %s359 = sphi 0, %s359
      %s361 = sphi 0, %s359
      %s362 = sphi 0, %s361
      %s376 = sphi 0, %s362
      %s380 = sphi 0, %s380
      %s382 = sphi 0, %s380
      %s383 = sphi 0, %s382
      %s397 = sphi 0, %s383
      %s403 = sphi 0, %s405
      %s406 = sphi 0, %s403
      %s407 = sphi 0, %s406
      %s423 = sphi 0, %s407
    $region4: #{tpu_custom_call.1} parent=1 // loop_header_branch
      %30 = sbr.rel (%p28) target = $region8
    $region5: #{tpu_custom_call.1} parent=1 // loop_body
      %s32 = ssub.s32 %s27, 1
      %s33 = ssub.s32 %s27, 2
      %s34 = sadd.s32 %s27, 1
      %s35 = ssub.s32 %s27, %s34
      %p36 = scmp.eq.s32.totalorder %s35, 0
      %s38 = sadd.s32 %s37, 1
      %s39 = scalar_select %p36, %s37, %s38
      %p42 = pneg %p36
      %p43 = scmp.eq.s32.totalorder %s27, 1
      %p44 = por %p42, %p43
      %p45 = scmp.ne.s32.totalorder %s37, %s40
      %p46 = scmp.eq.s32.totalorder %s27, 0
      %p47 = por %p45, %p46
      %p48 = scmp.ne.s32.totalorder %s37, %s40
      %p49 = scmp.eq.s32.totalorder %s32, 1
      %p50 = por %p48, %p49
      %p51 = scmp.ne.s32.totalorder %s40, %s41
      %p52 = scmp.eq.s32.totalorder %s32, 0
      %p53 = por %p51, %p52
      %p54 = scmp.ne.s32.totalorder %s40, %s41
      %p55 = scmp.eq.s32.totalorder %s33, 1
      %p56 = por %p54, %p55
      %p58 = scmp.ne.s32.totalorder %s41, %s57
      %p59 = scmp.eq.s32.totalorder %s33, 0
      %p60 = por %p58, %p59
      %s61 = ssub.s32 %s27, %s34
      %p62 = scmp.eq.s32.totalorder %s61, 0
      %s64 = sadd.s32 %s63, 1
      %s65 = scalar_select %p62, %s63, %s64
      %p68 = pneg %p62
      %p69 = scmp.eq.s32.totalorder %s27, 1
      %p70 = por %p68, %p69
      %p71 = scmp.ne.s32.totalorder %s63, %s66
      %p72 = scmp.eq.s32.totalorder %s27, 0
      %p73 = por %p71, %p72
      %p74 = scmp.ne.s32.totalorder %s63, %s66
      %p75 = scmp.eq.s32.totalorder %s32, 1
      %p76 = por %p74, %p75
      %p77 = scmp.ne.s32.totalorder %s66, %s67
      %p78 = scmp.eq.s32.totalorder %s32, 0
      %p79 = por %p77, %p78
      %p80 = scmp.ne.s32.totalorder %s66, %s67
      %p81 = scmp.eq.s32.totalorder %s33, 1
      %p82 = por %p80, %p81
      %p84 = scmp.ne.s32.totalorder %s67, %s83
      %p85 = scmp.eq.s32.totalorder %s33, 0
      %p86 = por %p84, %p85
      %s87 = ssub.s32 %s27, %s34
      %p88 = scmp.eq.s32.totalorder %s87, 0
      %s90 = sadd.s32 %s89, 1
      %s91 = scalar_select %p88, %s89, %s90
      %p94 = pneg %p88
      %p95 = scmp.eq.s32.totalorder %s27, 1
      %p96 = por %p94, %p95
      %p97 = scmp.ne.s32.totalorder %s89, %s92
      %p98 = scmp.eq.s32.totalorder %s27, 0
      %p99 = por %p97, %p98
      %p100 = scmp.ne.s32.totalorder %s89, %s92
      %p101 = scmp.eq.s32.totalorder %s32, 1
      %p102 = por %p100, %p101
      %p103 = scmp.ne.s32.totalorder %s92, %s93
      %p104 = scmp.eq.s32.totalorder %s32, 0
      %p105 = por %p103, %p104
      %p106 = scmp.ne.s32.totalorder %s92, %s93
      %p107 = scmp.eq.s32.totalorder %s33, 1
      %p108 = por %p106, %p107
      %p110 = scmp.ne.s32.totalorder %s93, %s109
      %p111 = scmp.eq.s32.totalorder %s33, 0
      %p112 = por %p110, %p111
      %s113 = ssub.s32 %s27, %s34
      %p114 = scmp.eq.s32.totalorder %s113, 0
      %s116 = sadd.s32 %s115, 1
      %s117 = scalar_select %p114, %s115, %s116
      %p120 = pneg %p114
      %p121 = scmp.eq.s32.totalorder %s27, 1
      %p122 = por %p120, %p121
      %p123 = scmp.ne.s32.totalorder %s115, %s118
      %p124 = scmp.eq.s32.totalorder %s27, 0
      %p125 = por %p123, %p124
      %p126 = scmp.ne.s32.totalorder %s115, %s118
      %p127 = scmp.eq.s32.totalorder %s32, 1
      %p128 = por %p126, %p127
      %p129 = scmp.ne.s32.totalorder %s118, %s119
      %p130 = scmp.eq.s32.totalorder %s32, 0
      %p131 = por %p129, %p130
      %p132 = scmp.ne.s32.totalorder %s118, %s119
      %p133 = scmp.eq.s32.totalorder %s33, 1
      %p134 = por %p132, %p133
      %p136 = scmp.ne.s32.totalorder %s119, %s135
      %p137 = scmp.eq.s32.totalorder %s33, 0
      %p138 = por %p136, %p137
      %s139 = ssub.s32 %s27, %s34
      %p140 = scmp.eq.s32.totalorder %s139, 0
      %s142 = sadd.s32 %s141, 1
      %s143 = scalar_select %p140, %s141, %s142
      %p146 = pneg %p140
      %p147 = scmp.eq.s32.totalorder %s27, 1
      %p148 = por %p146, %p147
      %p149 = scmp.ne.s32.totalorder %s141, %s144
      %p150 = scmp.eq.s32.totalorder %s27, 0
      %p151 = por %p149, %p150
      %p152 = scmp.ne.s32.totalorder %s141, %s144
      %p153 = scmp.eq.s32.totalorder %s32, 1
      %p154 = por %p152, %p153
      %p155 = scmp.ne.s32.totalorder %s144, %s145
      %p156 = scmp.eq.s32.totalorder %s32, 0
      %p157 = por %p155, %p156
      %p158 = scmp.ne.s32.totalorder %s144, %s145
      %p159 = scmp.eq.s32.totalorder %s33, 1
      %p160 = por %p158, %p159
      %p162 = scmp.ne.s32.totalorder %s145, %s161
      %p163 = scmp.eq.s32.totalorder %s33, 0
      %p164 = por %p162, %p163
      %s165 = ssub.s32 %s27, %s34
      %p166 = scmp.eq.s32.totalorder %s165, 0
      %s168 = sadd.s32 %s167, 1
      %s169 = scalar_select %p166, %s167, %s168
      %p172 = pneg %p166
      %p173 = scmp.eq.s32.totalorder %s27, 1
      %p174 = por %p172, %p173
      %p175 = scmp.ne.s32.totalorder %s167, %s170
      %p176 = scmp.eq.s32.totalorder %s27, 0
      %p177 = por %p175, %p176
      %p178 = scmp.ne.s32.totalorder %s167, %s170
      %p179 = scmp.eq.s32.totalorder %s32, 1
      %p180 = por %p178, %p179
      %p181 = scmp.ne.s32.totalorder %s170, %s171
      %p182 = scmp.eq.s32.totalorder %s32, 0
      %p183 = por %p181, %p182
      %p184 = scmp.ne.s32.totalorder %s170, %s171
      %p185 = scmp.eq.s32.totalorder %s33, 1
      %p186 = por %p184, %p185
      %p188 = scmp.ne.s32.totalorder %s171, %s187
      %p189 = scmp.eq.s32.totalorder %s33, 0
      %p190 = por %p188, %p189
      %s192 = sadd.s32 %s191, 1
      %p195 = scmp.eq.s32.totalorder %s27, 1
      %p196 = scmp.ne.s32.totalorder %s191, %s193
      %p197 = scmp.eq.s32.totalorder %s27, 0
      %p198 = por %p196, %p197
      %p199 = scmp.ne.s32.totalorder %s191, %s193
      %p200 = scmp.eq.s32.totalorder %s32, 1
      %p201 = por %p199, %p200
      %p202 = scmp.ne.s32.totalorder %s193, %s194
      %p203 = scmp.eq.s32.totalorder %s32, 0
      %p204 = por %p202, %p203
      %p205 = scmp.ne.s32.totalorder %s193, %s194
      %p206 = scmp.eq.s32.totalorder %s33, 1
      %p207 = por %p205, %p206
      %p209 = scmp.ne.s32.totalorder %s194, %s208
      %p210 = scmp.eq.s32.totalorder %s33, 0
      %p211 = por %p209, %p210
      %s213 = sadd.s32 %s212, 1
      %p216 = scmp.eq.s32.totalorder %s27, 1
      %p217 = scmp.ne.s32.totalorder %s212, %s214
      %p218 = scmp.eq.s32.totalorder %s27, 0
      %p219 = por %p217, %p218
      %p220 = scmp.ne.s32.totalorder %s212, %s214
      %p221 = scmp.eq.s32.totalorder %s32, 1
      %p222 = por %p220, %p221
      %p223 = scmp.ne.s32.totalorder %s214, %s215
      %p224 = scmp.eq.s32.totalorder %s32, 0
      %p225 = por %p223, %p224
      %p226 = scmp.ne.s32.totalorder %s214, %s215
      %p227 = scmp.eq.s32.totalorder %s33, 1
      %p228 = por %p226, %p227
      %p230 = scmp.ne.s32.totalorder %s215, %s229
      %p231 = scmp.eq.s32.totalorder %s33, 0
      %p232 = por %p230, %p231
      %s234 = sadd.s32 %s233, 1
      %p237 = scmp.eq.s32.totalorder %s27, 1
      %p238 = scmp.ne.s32.totalorder %s233, %s235
      %p239 = scmp.eq.s32.totalorder %s27, 0
      %p240 = por %p238, %p239
      %p241 = scmp.ne.s32.totalorder %s233, %s235
      %p242 = scmp.eq.s32.totalorder %s32, 1
      %p243 = por %p241, %p242
      %p244 = scmp.ne.s32.totalorder %s235, %s236
      %p245 = scmp.eq.s32.totalorder %s32, 0
      %p246 = por %p244, %p245
      %p247 = scmp.ne.s32.totalorder %s235, %s236
      %p248 = scmp.eq.s32.totalorder %s33, 1
      %p249 = por %p247, %p248
      %p251 = scmp.ne.s32.totalorder %s236, %s250
      %p252 = scmp.eq.s32.totalorder %s33, 0
      %p253 = por %p251, %p252
      %s255 = sadd.s32 %s254, 1
      %p258 = scmp.eq.s32.totalorder %s27, 1
      %p259 = scmp.ne.s32.totalorder %s254, %s256
      %p260 = scmp.eq.s32.totalorder %s27, 0
      %p261 = por %p259, %p260
      %p262 = scmp.ne.s32.totalorder %s254, %s256
      %p263 = scmp.eq.s32.totalorder %s32, 1
      %p264 = por %p262, %p263
      %p265 = scmp.ne.s32.totalorder %s256, %s257
      %p266 = scmp.eq.s32.totalorder %s32, 0
      %p267 = por %p265, %p266
      %p268 = scmp.ne.s32.totalorder %s256, %s257
      %p269 = scmp.eq.s32.totalorder %s33, 1
      %p270 = por %p268, %p269
      %p272 = scmp.ne.s32.totalorder %s257, %s271
      %p273 = scmp.eq.s32.totalorder %s33, 0
      %p274 = por %p272, %p273
      %s276 = sadd.s32 %s275, 1
      %p279 = scmp.eq.s32.totalorder %s27, 1
      %p280 = scmp.ne.s32.totalorder %s275, %s277
      %p281 = scmp.eq.s32.totalorder %s27, 0
      %p282 = por %p280, %p281
      %p283 = scmp.ne.s32.totalorder %s275, %s277
      %p284 = scmp.eq.s32.totalorder %s32, 1
      %p285 = por %p283, %p284
      %p286 = scmp.ne.s32.totalorder %s277, %s278
      %p287 = scmp.eq.s32.totalorder %s32, 0
      %p288 = por %p286, %p287
      %p289 = scmp.ne.s32.totalorder %s277, %s278
      %p290 = scmp.eq.s32.totalorder %s33, 1
      %p291 = por %p289, %p290
      %p293 = scmp.ne.s32.totalorder %s278, %s292
      %p294 = scmp.eq.s32.totalorder %s33, 0
      %p295 = por %p293, %p294
      %s297 = sadd.s32 %s296, 1
      %p300 = scmp.eq.s32.totalorder %s27, 1
      %p301 = scmp.ne.s32.totalorder %s296, %s298
      %p302 = scmp.eq.s32.totalorder %s27, 0
      %p303 = por %p301, %p302
      %p304 = scmp.ne.s32.totalorder %s296, %s298
      %p305 = scmp.eq.s32.totalorder %s32, 1
      %p306 = por %p304, %p305
      %p307 = scmp.ne.s32.totalorder %s298, %s299
      %p308 = scmp.eq.s32.totalorder %s32, 0
      %p309 = por %p307, %p308
      %p310 = scmp.ne.s32.totalorder %s298, %s299
      %p311 = scmp.eq.s32.totalorder %s33, 1
      %p312 = por %p310, %p311
      %p314 = scmp.ne.s32.totalorder %s299, %s313
      %p315 = scmp.eq.s32.totalorder %s33, 0
      %p316 = por %p314, %p315
      %s318 = sadd.s32 %s317, 1
      %p321 = scmp.eq.s32.totalorder %s27, 1
      %p322 = scmp.ne.s32.totalorder %s317, %s319
      %p323 = scmp.eq.s32.totalorder %s27, 0
      %p324 = por %p322, %p323
      %p325 = scmp.ne.s32.totalorder %s317, %s319
      %p326 = scmp.eq.s32.totalorder %s32, 1
      %p327 = por %p325, %p326
      %p328 = scmp.ne.s32.totalorder %s319, %s320
      %p329 = scmp.eq.s32.totalorder %s32, 0
      %p330 = por %p328, %p329
      %p331 = scmp.ne.s32.totalorder %s319, %s320
      %p332 = scmp.eq.s32.totalorder %s33, 1
      %p333 = por %p331, %p332
      %p335 = scmp.ne.s32.totalorder %s320, %s334
      %p336 = scmp.eq.s32.totalorder %s33, 0
      %p337 = por %p335, %p336
      %s339 = sadd.s32 %s338, 1
      %p342 = scmp.eq.s32.totalorder %s27, 1
      %p343 = scmp.ne.s32.totalorder %s338, %s340
      %p344 = scmp.eq.s32.totalorder %s27, 0
      %p345 = por %p343, %p344
      %p346 = scmp.ne.s32.totalorder %s338, %s340
      %p347 = scmp.eq.s32.totalorder %s32, 1
      %p348 = por %p346, %p347
      %p349 = scmp.ne.s32.totalorder %s340, %s341
      %p350 = scmp.eq.s32.totalorder %s32, 0
      %p351 = por %p349, %p350
      %p352 = scmp.ne.s32.totalorder %s340, %s341
      %p353 = scmp.eq.s32.totalorder %s33, 1
      %p354 = por %p352, %p353
      %p356 = scmp.ne.s32.totalorder %s341, %s355
      %p357 = scmp.eq.s32.totalorder %s33, 0
      %p358 = por %p356, %p357
      %s360 = sadd.s32 %s359, 1
      %p363 = scmp.eq.s32.totalorder %s27, 1
      %p364 = scmp.ne.s32.totalorder %s359, %s361
      %p365 = scmp.eq.s32.totalorder %s27, 0
      %p366 = por %p364, %p365
      %p367 = scmp.ne.s32.totalorder %s359, %s361
      %p368 = scmp.eq.s32.totalorder %s32, 1
      %p369 = por %p367, %p368
      %p370 = scmp.ne.s32.totalorder %s361, %s362
      %p371 = scmp.eq.s32.totalorder %s32, 0
      %p372 = por %p370, %p371
      %p373 = scmp.ne.s32.totalorder %s361, %s362
      %p374 = scmp.eq.s32.totalorder %s33, 1
      %p375 = por %p373, %p374
      %p377 = scmp.ne.s32.totalorder %s362, %s376
      %p378 = scmp.eq.s32.totalorder %s33, 0
      %p379 = por %p377, %p378
      %s381 = sadd.s32 %s380, 1
      %p384 = scmp.eq.s32.totalorder %s27, 1
      %p385 = scmp.ne.s32.totalorder %s380, %s382
      %p386 = scmp.eq.s32.totalorder %s27, 0
      %p387 = por %p385, %p386
      %p388 = scmp.ne.s32.totalorder %s380, %s382
      %p389 = scmp.eq.s32.totalorder %s32, 1
      %p390 = por %p388, %p389
      %p391 = scmp.ne.s32.totalorder %s382, %s383
      %p392 = scmp.eq.s32.totalorder %s32, 0
      %p393 = por %p391, %p392
      %p394 = scmp.ne.s32.totalorder %s382, %s383
      %p395 = scmp.eq.s32.totalorder %s33, 1
      %p396 = por %p394, %p395
      %p398 = scmp.ne.s32.totalorder %s383, %s397
      %p399 = scmp.eq.s32.totalorder %s33, 0
      %p400 = por %p398, %p399
      %s401 = ssub.s32 %s27, %s34
      %p402 = scmp.eq.s32.totalorder %s401, 0
      %s404 = sadd.s32 %s403, 1
      %s405 = scalar_select %p402, %s403, %s404
      %p408 = pneg %p402
      %p409 = scmp.eq.s32.totalorder %s27, 1
      %p410 = por %p408, %p409
      %p411 = scmp.ne.s32.totalorder %s403, %s406
      %p412 = scmp.eq.s32.totalorder %s27, 0
      %p413 = por %p411, %p412
      %p414 = scmp.ne.s32.totalorder %s403, %s406
      %p415 = scmp.eq.s32.totalorder %s32, 1
      %p416 = por %p414, %p415
      %p417 = scmp.ne.s32.totalorder %s406, %s407
      %p418 = scmp.eq.s32.totalorder %s32, 0
      %p419 = por %p417, %p418
      %p420 = scmp.ne.s32.totalorder %s406, %s407
      %p421 = scmp.eq.s32.totalorder %s33, 1
      %p422 = por %p420, %p421
      %p424 = scmp.ne.s32.totalorder %s407, %s423
      %p425 = scmp.eq.s32.totalorder %s33, 0
      %p426 = por %p424, %p425
      %p427 = scmp.le.s32.totalorder 1, %s27
      %p428 = scmp.lt.s32.totalorder %s27, 3
      %p429 = pnand %p427, %p428
      %p430 = pneg %p429
      // Predicated region
      $region9: #{tpu_custom_call.1} parent=5 // pred_check
        _
      $region10: #{tpu_custom_call.1} parent=5 // pred_check_branch
        %432 = sbr.rel (%p429) target = $region12
      $region11: #{tpu_custom_call.1} parent=5 // pred_region
        %s433 = ssub.s32 %s27, 1
        // Predicated region
        $region13: #{tpu_custom_call.1} parent=11 // pred_check
          %p434 = pneg %p204
        $region14: #{tpu_custom_call.1} parent=11 // pred_check_branch
          %436 = sbr.rel (%p434) target = $region16
        $region15: #{tpu_custom_call.1} parent=11 // pred_region
          _
        $region16: #{tpu_custom_call.1} parent=11 // pred_fallthru
          _
        // Predicated region
        $region17: #{tpu_custom_call.1} parent=11 // pred_check
          %p437 = pneg %p225
        $region18: #{tpu_custom_call.1} parent=11 // pred_check_branch
          %439 = sbr.rel (%p437) target = $region20
        $region19: #{tpu_custom_call.1} parent=11 // pred_region
          _
        $region20: #{tpu_custom_call.1} parent=11 // pred_fallthru
          _
        // Predicated region
        $region21: #{tpu_custom_call.1} parent=11 // pred_check
          %p440 = pneg %p246
        $region22: #{tpu_custom_call.1} parent=11 // pred_check_branch
          %442 = sbr.rel (%p440) target = $region24
        $region23: #{tpu_custom_call.1} parent=11 // pred_region
          _
        $region24: #{tpu_custom_call.1} parent=11 // pred_fallthru
          _
        // Predicated region
        $region25: #{tpu_custom_call.1} parent=11 // pred_check
          %p443 = pneg %p267
        $region26: #{tpu_custom_call.1} parent=11 // pred_check_branch
          %445 = sbr.rel (%p443) target = $region28
        $region27: #{tpu_custom_call.1} parent=11 // pred_region
          _
        $region28: #{tpu_custom_call.1} parent=11 // pred_fallthru
          _
        // Predicated region
        $region29: #{tpu_custom_call.1} parent=11 // pred_check
          %p446 = pneg %p288
        $region30: #{tpu_custom_call.1} parent=11 // pred_check_branch
          %448 = sbr.rel (%p446) target = $region32
        $region31: #{tpu_custom_call.1} parent=11 // pred_region
          _
        $region32: #{tpu_custom_call.1} parent=11 // pred_fallthru
          _
        // Predicated region
        $region33: #{tpu_custom_call.1} parent=11 // pred_check
          %p449 = pneg %p309
        $region34: #{tpu_custom_call.1} parent=11 // pred_check_branch
          %451 = sbr.rel (%p449) target = $region36
        $region35: #{tpu_custom_call.1} parent=11 // pred_region
          _
        $region36: #{tpu_custom_call.1} parent=11 // pred_fallthru
          _
        // Predicated region
        $region37: #{tpu_custom_call.1} parent=11 // pred_check
          %p452 = pneg %p330
        $region38: #{tpu_custom_call.1} parent=11 // pred_check_branch
          %454 = sbr.rel (%p452) target = $region40
        $region39: #{tpu_custom_call.1} parent=11 // pred_region
          _
        $region40: #{tpu_custom_call.1} parent=11 // pred_fallthru
          _
        // Predicated region
        $region41: #{tpu_custom_call.1} parent=11 // pred_check
          %p455 = pneg %p351
        $region42: #{tpu_custom_call.1} parent=11 // pred_check_branch
          %457 = sbr.rel (%p455) target = $region44
        $region43: #{tpu_custom_call.1} parent=11 // pred_region
          _
        $region44: #{tpu_custom_call.1} parent=11 // pred_fallthru
          _
        // Predicated region
        $region45: #{tpu_custom_call.1} parent=11 // pred_check
          %p458 = pneg %p372
        $region46: #{tpu_custom_call.1} parent=11 // pred_check_branch
          %460 = sbr.rel (%p458) target = $region48
        $region47: #{tpu_custom_call.1} parent=11 // pred_region
          _
        $region48: #{tpu_custom_call.1} parent=11 // pred_fallthru
          _
        // Predicated region
        $region49: #{tpu_custom_call.1} parent=11 // pred_check
          %p461 = pneg %p393
        $region50: #{tpu_custom_call.1} parent=11 // pred_check_branch
          %463 = sbr.rel (%p461) target = $region52
        $region51: #{tpu_custom_call.1} parent=11 // pred_region
          _
        $region52: #{tpu_custom_call.1} parent=11 // pred_fallthru
          _
      $region12: #{tpu_custom_call.1} parent=5 // pred_fallthru
        _
      %p464 = scmp.lt.s32.totalorder %s27, 2
      // Predicated region
      $region53: #{tpu_custom_call.1} parent=5 // pred_check
        %p465 = pneg %p464
      $region54: #{tpu_custom_call.1} parent=5 // pred_check_branch
        %467 = sbr.rel (%p465) target = $region56
      $region55: #{tpu_custom_call.1} parent=5 // pred_region
        // Predicated region
        $region57: #{tpu_custom_call.1} parent=55 // pred_check
          %p468 = pneg %p47
        $region58: #{tpu_custom_call.1} parent=55 // pred_check_branch
          %470 = sbr.rel (%p468) target = $region60
        $region59: #{tpu_custom_call.1} parent=55 // pred_region
          %p471 = scmp.lt.s32.totalorder %s27, 1
          %s472 = scalar_select %p471, %s27, 1
          %s473 = smul.addr %s472, 2
          %s474 = smul.addr %s473, 8
          %s475 = scalar_lea.vmem %s0, %s474
        $region60: #{tpu_custom_call.1} parent=55 // pred_fallthru
          _
        // Predicated region
        $region61: #{tpu_custom_call.1} parent=55 // pred_check
          %p476 = pneg %p73
        $region62: #{tpu_custom_call.1} parent=55 // pred_check_branch
          %478 = sbr.rel (%p476) target = $region64
        $region63: #{tpu_custom_call.1} parent=55 // pred_region
          %p479 = scmp.lt.s32.totalorder %s27, 1
          %s480 = scalar_select %p479, %s27, 1
          %s481 = smul.addr %s480, 2
          %s482 = smul.addr %s481, 8
          %s483 = scalar_lea.vmem %s1, %s482
        $region64: #{tpu_custom_call.1} parent=55 // pred_fallthru
          _
        // Predicated region
        $region65: #{tpu_custom_call.1} parent=55 // pred_check
          %p484 = pneg %p99
        $region66: #{tpu_custom_call.1} parent=55 // pred_check_branch
          %486 = sbr.rel (%p484) target = $region68
        $region67: #{tpu_custom_call.1} parent=55 // pred_region
          %p487 = scmp.lt.s32.totalorder %s27, 1
          %s488 = scalar_select %p487, %s27, 1
          %s489 = smul.addr %s488, 8
          %s490 = scalar_lea.vmem %s2, %s489
        $region68: #{tpu_custom_call.1} parent=55 // pred_fallthru
          _
        // Predicated region
        $region69: #{tpu_custom_call.1} parent=55 // pred_check
          %p491 = pneg %p125
        $region70: #{tpu_custom_call.1} parent=55 // pred_check_branch
          %493 = sbr.rel (%p491) target = $region72
        $region71: #{tpu_custom_call.1} parent=55 // pred_region
          %p494 = scmp.lt.s32.totalorder %s27, 1
          %s495 = scalar_select %p494, %s27, 1
          %s496 = smul.addr %s495, 8
          %s497 = scalar_lea.vmem %s3, %s496
        $region72: #{tpu_custom_call.1} parent=55 // pred_fallthru
          _
        // Predicated region
        $region73: #{tpu_custom_call.1} parent=55 // pred_check
          %p498 = pneg %p151
        $region74: #{tpu_custom_call.1} parent=55 // pred_check_branch
          %500 = sbr.rel (%p498) target = $region76
        $region75: #{tpu_custom_call.1} parent=55 // pred_region
          %p501 = scmp.lt.s32.totalorder %s27, 1
          %s502 = scalar_select %p501, %s27, 1
          %s503 = smul.addr %s502, 8
          %s504 = scalar_lea.vmem %s4, %s503
        $region76: #{tpu_custom_call.1} parent=55 // pred_fallthru
          _
        // Predicated region
        $region77: #{tpu_custom_call.1} parent=55 // pred_check
          %p505 = pneg %p177
        $region78: #{tpu_custom_call.1} parent=55 // pred_check_branch
          %507 = sbr.rel (%p505) target = $region80
        $region79: #{tpu_custom_call.1} parent=55 // pred_region
          %p508 = scmp.lt.s32.totalorder %s27, 1
          %s509 = scalar_select %p508, %s27, 1
          %s510 = smul.addr %s509, 8
          %s511 = scalar_lea.vmem %s5, %s510
        $region80: #{tpu_custom_call.1} parent=55 // pred_fallthru
          _
      $region56: #{tpu_custom_call.1} parent=5 // pred_fallthru
        _
      %p512 = scmp.le.s32.totalorder 1, %s27
      %p513 = scmp.lt.s32.totalorder %s27, 3
      %p514 = pnand %p512, %p513
      %p515 = pneg %p514
      // Predicated region
      $region81: #{tpu_custom_call.1} parent=5 // pred_check
        _
      $region82: #{tpu_custom_call.1} parent=5 // pred_check_branch
        %517 = sbr.rel (%p514) target = $region84
      $region83: #{tpu_custom_call.1} parent=5 // pred_region
        %s518 = ssub.s32 %s27, 1
        %p519 = scmp.lt.s32.totalorder %s32, 1
        %s520 = scalar_select %p519, %s32, 1
        %s521 = smul.addr %s520, 2
        %s522 = smul.addr %s521, 8
        %s523 = scalar_lea.vmem %s0, %s522
        %p524 = pneg %p53
        %p525 = pneg %p50
        %p526 = scmp.lt.s32.totalorder %s32, 1
        %s527 = scalar_select %p526, %s32, 1
        %s528 = smul.addr %s527, 2
        %s529 = smul.addr %s528, 8
        %s530 = scalar_lea.vmem %s1, %s529
        %p531 = pneg %p79
        %p532 = pneg %p76
        %p533 = scmp.lt.s32.totalorder %s32, 1
        %s534 = scalar_select %p533, %s32, 1
        %s535 = smul.addr %s534, 8
        %s536 = scalar_lea.vmem %s2, %s535
        %p537 = pneg %p105
        %p538 = pneg %p102
        %p539 = scmp.lt.s32.totalorder %s32, 1
        %s540 = scalar_select %p539, %s32, 1
        %s541 = smul.addr %s540, 8
        %s542 = scalar_lea.vmem %s3, %s541
        %p543 = pneg %p131
        %p544 = pneg %p128
        %p545 = scmp.lt.s32.totalorder %s32, 1
        %s546 = scalar_select %p545, %s32, 1
        %s547 = smul.addr %s546, 8
        %s548 = scalar_lea.vmem %s4, %s547
        %p549 = pneg %p157
        %p550 = pneg %p154
        %p551 = scmp.lt.s32.totalorder %s32, 1
        %s552 = scalar_select %p551, %s32, 1
        %s553 = smul.addr %s552, 8
        %s554 = scalar_lea.vmem %s5, %s553
        %p555 = pneg %p183
        %p556 = pneg %p180
        %p557 = pneg %p204
        %p558 = pneg %p201
        %p559 = pneg %p225
        %p560 = pneg %p222
        %p561 = pneg %p246
        %p562 = pneg %p243
        %p563 = pneg %p267
        %p564 = pneg %p264
        %p565 = pneg %p288
        %p566 = pneg %p285
        %p567 = pneg %p309
        %p568 = pneg %p306
        %p569 = pneg %p330
        %p570 = pneg %p327
        %p571 = pneg %p351
        %p572 = pneg %p348
        %p573 = pneg %p372
        %p574 = pneg %p369
        %p575 = pneg %p393
        %p576 = pneg %p390
        %p577 = pneg %p419
        %p578 = pneg %p416
        %s579 = sand.u32 %s406, 1
        %s580 = scalar_lea.sflag [#allocation4], %s579
        %s581 = sand.u32 %s406, 1
        %s582 = smul.addr %s581, 8
        %s583 = scalar_lea.vmem [#allocation3], %s582
        %p584 = scmp.lt.s32.totalorder %s32, 1
        %s585 = scalar_select %p584, %s32, 1
        %s586 = smul.addr %s585, 2
        %s587 = smul.addr %s586, 8
        %s588 = scalar_lea.vmem %s0, %s587
        %p589 = scmp.lt.s32.totalorder %s32, 1
        %s590 = scalar_select %p589, %s32, 1
        %s591 = smul.addr %s590, 2
        %s592 = smul.addr %s591, 8
        %s593 = scalar_lea.vmem %s1, %s592
        %p594 = scmp.lt.s32.totalorder %s32, 1
        %s595 = scalar_select %p594, %s32, 1
        %s596 = smul.addr %s595, 8
        %s597 = scalar_lea.vmem %s2, %s596
        %p598 = scmp.lt.s32.totalorder %s32, 1
        %s599 = scalar_select %p598, %s32, 1
        %s600 = smul.addr %s599, 8
        %s601 = scalar_lea.vmem %s3, %s600
        %p602 = scmp.lt.s32.totalorder %s32, 1
        %s603 = scalar_select %p602, %s32, 1
        %s604 = smul.addr %s603, 8
        %s605 = scalar_lea.vmem %s4, %s604
        %p606 = scmp.lt.s32.totalorder %s32, 1
        %s607 = scalar_select %p606, %s32, 1
        %s608 = smul.addr %s607, 8
        %s609 = scalar_lea.vmem %s5, %s608
        %v611 = vld [vmem:[%s588] sm:$0xff]
        %v612 = vld [vmem:[%s588 + $0x8] sm:$0xff]
        %v613 = vld [vmem:[%s593] sm:$0xff]
        %v614 = vld [vmem:[%s593 + $0x8] sm:$0xff]
        %v615 = vld [vmem:[%s597] sm:$0xff]
        %v616 = vld [vmem:[%s601] sm:$0xff]
        %v617 = vpack.c.bf16 %v612, %v611
        %v618 = vld [vmem:[%s6] sm:$0xff]
        %v619 = vld [vmem:[%s6 + $0x8] sm:$0xff]
        %v620 = vld [vmem:[%s6 + $0x10] sm:$0xff]
        %v621 = vld [vmem:[%s6 + $0x18] sm:$0xff]
        %v622 = vld [vmem:[%s6 + $0x20] sm:$0xff]
        %v623 = vld [vmem:[%s6 + $0x28] sm:$0xff]
        %v624 = vld [vmem:[%s6 + $0x30] sm:$0xff]
        %v625 = vld [vmem:[%s6 + $0x38] sm:$0xff]
        %v626 = vpack.c.bf16 %v619, %v618
        %v627 = vpack.c.bf16 %v621, %v620
        %v628 = vpack.c.bf16 %v623, %v622
        %v629 = vpack.c.bf16 %v625, %v624
        %v630 = vld [vmem:[%s7] sm:$0x1]
        %v632 = vperm.slane %v630, 0
        %vm634 = vcmask 523264
        %v636 = vsel %vm634, %v617, 0
        %638 = vmatpush.bf16.msra.mxu0 0
        %639 = vmatpush.bf16.msra.mxu0 0
        %640 = vmatpush.bf16.msra.mxu0 0
        %641 = vmatpush.bf16.msra.mxu0 0
        %642 = vmatpush.bf16.msra.mxu0 %v629
        %643 = vmatpush.bf16.msra.mxu0 %v628
        %644 = vmatpush.bf16.msra.mxu0 %v627
        %645 = vmatpush.bf16.msra.mxu0 %v626
        %646 = vmatmul.bf16.gmra.mxu0 %v636
        %v647 = vpop.f32.mrf.mxu0
        %v648 = vadd.f32 %v632, %v647
        %v649 = vpop.f32.mrf.mxu0
        %v650 = vadd.f32 %v632, %v649
        %651 = vdwg.mxu0
        %654 = vrot.lane.b32.xlu0 %v613, 32
        %v655 = vpop.permute.xlu0 %654
        %656 = vrot.lane.b32.xlu0 %v614, 32
        %v657 = vpop.permute.xlu0 %656
        %vm660 = vcmask 261120
        %v661 = vsel %vm660, %v648, %v655
        %v662 = vsel %vm660, %v650, %v657
        %v663 = vpack.c.bf16 %v662, %v661
        %v664 = vpack.c.bf16 %v616, %v615
        %vm665 = vcmask 130048
        %v667 = vsel %vm665, %v664, 0
        %669 = vmatpush.bf16.msra.mxu0 0
        %670 = vmatpush.bf16.msra.mxu0 0
        %671 = vmatpush.bf16.msra.mxu0 0
        %672 = vmatpush.bf16.msra.mxu0 0
        %673 = vmatpush.bf16.msra.mxu0 0
        %674 = vmatpush.bf16.msra.mxu0 0
        %675 = vmatpush.bf16.msra.mxu0 0
        %676 = vmatpush.bf16.msra.mxu0 %v663
        %677 = vmatmul.bf16.gmra.mxu0 %v667
        %v678 = vpop.f32.mrf.mxu0
        %v679 = vadd.f32 0.0, %v678
        %v680 = vpop.f32.mrf.mxu0
        %v681 = vadd.f32 0.0, %v680
        %682 = vdwg.mxu0
        %v683 = vld [vmem:[%s9] sm:$0xff]
        %v684 = vld [vmem:[%s9 + $0x8] sm:$0xff]
        %v685 = vld [vmem:[%s9 + $0x10] sm:$0xff]
        %v686 = vld [vmem:[%s9 + $0x18] sm:$0xff]
        %v687 = vld [vmem:[%s9 + $0x20] sm:$0xff]
        %v688 = vpack.c.bf16 %v684, %v683
        %v689 = vpack.c.bf16 %v686, %v685
        %v690 = vpack.c.bf16 %v687, %v687
        %v691 = vld [vmem:[%s10] sm:$0x1]
        %v693 = vperm.slane %v691, 0
        %vm695 = vcmask 326656
        %v697 = vsel %vm695, %v663, 0
        %vm699 = vcmask 1043456
        %v701 = vsel %vm699, %v690, 0
        %703 = vmatpush.bf16.msra.mxu0 0
        %704 = vmatpush.bf16.msra.mxu0 0
        %705 = vmatpush.bf16.msra.mxu0 0
        %706 = vmatpush.bf16.msra.mxu0 0
        %707 = vmatpush.bf16.msra.mxu0 0
        %708 = vmatpush.bf16.msra.mxu0 %v701
        %709 = vmatpush.bf16.msra.mxu0 %v689
        %710 = vmatpush.bf16.msra.mxu0 %v688
        %711 = vmatmul.bf16.gmra.mxu0 %v697
        %v712 = vpop.f32.mrf.mxu0
        %v713 = vadd.f32 %v693, %v712
        %v714 = vpop.f32.mrf.mxu0
        %v715 = vadd.f32 %v693, %v714
        %716 = vdwg.mxu0
        %v717 = vld [vmem:[%s8] sm:$0xff]
        %v718 = vld [vmem:[%s8 + $0x8] sm:$0xff]
        %v719 = vld [vmem:[%s8 + $0x10] sm:$0xff]
        %v720 = vld [vmem:[%s8 + $0x18] sm:$0xff]
        %v721 = vld [vmem:[%s8 + $0x20] sm:$0xff]
        %v722 = vpack.c.bf16 %v718, %v717
        %v723 = vpack.c.bf16 %v720, %v719
        %v724 = vpack.c.bf16 %v721, %v721
        %v725 = vld [vmem:[%s11] sm:$0x1]
        %v726 = vld [vmem:[#allocation2] sm:$0x1]
        %v727 = vpack.c.bf16 %v679, %v679
        %v729 = vsel %vm695, %v727, 0
        %v732 = vsel %vm699, %v724, 0
        %734 = vmatpush.bf16.msra.mxu0 0
        %735 = vmatpush.bf16.msra.mxu0 0
        %736 = vmatpush.bf16.msra.mxu0 0
        %737 = vmatpush.bf16.msra.mxu0 0
        %738 = vmatpush.bf16.msra.mxu0 0
        %739 = vmatpush.bf16.msra.mxu0 %v732
        %740 = vmatpush.bf16.msra.mxu0 %v723
        %741 = vmatpush.bf16.msra.mxu0 %v722
        %742 = vmatmul.bf16.gmra.mxu0 %v729
        %v743 = vpop.f32.mrf.mxu0
        %v744 = vadd.f32 0.0, %v743
        %v745 = vpop.f32.mrf.mxu0
        %746 = vdwg.mxu0
        %v748 = vrot.slane %v744, 1
        %v749 = vrot.slane %v744, 2
        %v750 = vrot.slane %v744, 3
        %v751 = vrot.slane %v744, 4
        %v752 = vrot.slane %v744, 5
        %v753 = vrot.slane %v744, 6
        %v754 = vrot.slane %v744, 7
        %v755 = vperm.slane %v744, 0
        %v756 = vperm.slane %v748, 0
        %v757 = vperm.slane %v749, 0
        %v758 = vperm.slane %v750, 0
        %v759 = vperm.slane %v751, 0
        %v760 = vperm.slane %v752, 0
        %v761 = vperm.slane %v753, 0
        %v762 = vperm.slane %v754, 0
        %v771 = vadd.f32 %v713, %v755
        %v772 = vadd.f32 %v715, %v755
        %v773 = vadd.f32 %v713, %v756
        %v774 = vadd.f32 %v715, %v756
        %v775 = vadd.f32 %v713, %v757
        %v776 = vadd.f32 %v715, %v757
        %v777 = vadd.f32 %v713, %v758
        %v778 = vadd.f32 %v715, %v758
        %v779 = vadd.f32 %v713, %v759
        %v780 = vadd.f32 %v715, %v759
        %v781 = vadd.f32 %v713, %v760
        %v782 = vadd.f32 %v715, %v760
        %v783 = vadd.f32 %v713, %v761
        %v784 = vadd.f32 %v715, %v761
        %v785 = vadd.f32 %v713, %v762
        %v786 = vadd.f32 %v715, %v762
        %v787 = vtanh.pop %v771
        %v788 = vtanh.pop %v772
        %v789 = vtanh.pop %v773
        %v790 = vtanh.pop %v774
        %v791 = vtanh.pop %v775
        %v792 = vtanh.pop %v776
        %v793 = vtanh.pop %v777
        %v794 = vtanh.pop %v778
        %v795 = vtanh.pop %v779
        %v796 = vtanh.pop %v780
        %v797 = vtanh.pop %v781
        %v798 = vtanh.pop %v782
        %v799 = vtanh.pop %v783
        %v800 = vtanh.pop %v784
        %v801 = vtanh.pop %v785
        %v802 = vtanh.pop %v786
        %v804 = vperm.slane %v725, 0
        %v806 = vmul.f32 %v787, %v804
        %v807 = vmul.f32 %v788, %v804
        %v808 = vmul.f32 %v789, %v804
        %v809 = vmul.f32 %v790, %v804
        %v810 = vmul.f32 %v791, %v804
        %v811 = vmul.f32 %v792, %v804
        %v812 = vmul.f32 %v793, %v804
        %v813 = vmul.f32 %v794, %v804
        %v814 = vmul.f32 %v795, %v804
        %v815 = vmul.f32 %v796, %v804
        %v816 = vmul.f32 %v797, %v804
        %v817 = vmul.f32 %v798, %v804
        %v818 = vmul.f32 %v799, %v804
        %v819 = vmul.f32 %v800, %v804
        %v820 = vmul.f32 %v801, %v804
        %v821 = vmul.f32 %v802, %v804
        %v822 = vsel %vm695, %v806, 0.0
        %823 = vadd.xlane.f32.xlu0 %v822
        %v824 = vpop.xlane.xlu0 %823
        %v825 = vsel %vm695, %v807, 0.0
        %826 = vadd.xlane.f32.xlu0 %v825
        %v827 = vpop.xlane.xlu0 %826
        %v828 = vsel %vm695, %v808, 0.0
        %829 = vadd.xlane.f32.xlu0 %v828
        %v830 = vpop.xlane.xlu0 %829
        %v831 = vsel %vm695, %v809, 0.0
        %832 = vadd.xlane.f32.xlu0 %v831
        %v833 = vpop.xlane.xlu0 %832
        %v834 = vsel %vm695, %v810, 0.0
        %835 = vadd.xlane.f32.xlu0 %v834
        %v836 = vpop.xlane.xlu0 %835
        %v837 = vsel %vm695, %v811, 0.0
        %838 = vadd.xlane.f32.xlu0 %v837
        %v839 = vpop.xlane.xlu0 %838
        %v840 = vsel %vm695, %v812, 0.0
        %841 = vadd.xlane.f32.xlu0 %v840
        %v842 = vpop.xlane.xlu0 %841
        %v843 = vsel %vm695, %v813, 0.0
        %844 = vadd.xlane.f32.xlu0 %v843
        %v845 = vpop.xlane.xlu0 %844
        %v846 = vsel %vm695, %v814, 0.0
        %847 = vadd.xlane.f32.xlu0 %v846
        %v848 = vpop.xlane.xlu0 %847
        %v849 = vsel %vm695, %v815, 0.0
        %850 = vadd.xlane.f32.xlu0 %v849
        %v851 = vpop.xlane.xlu0 %850
        %v852 = vsel %vm695, %v816, 0.0
        %853 = vadd.xlane.f32.xlu0 %v852
        %v854 = vpop.xlane.xlu0 %853
        %v855 = vsel %vm695, %v817, 0.0
        %856 = vadd.xlane.f32.xlu0 %v855
        %v857 = vpop.xlane.xlu0 %856
        %v858 = vsel %vm695, %v818, 0.0
        %859 = vadd.xlane.f32.xlu0 %v858
        %v860 = vpop.xlane.xlu0 %859
        %v861 = vsel %vm695, %v819, 0.0
        %862 = vadd.xlane.f32.xlu0 %v861
        %v863 = vpop.xlane.xlu0 %862
        %v864 = vsel %vm695, %v820, 0.0
        %865 = vadd.xlane.f32.xlu0 %v864
        %v866 = vpop.xlane.xlu0 %865
        %v867 = vsel %vm695, %v821, 0.0
        %868 = vadd.xlane.f32.xlu0 %v867
        %v869 = vpop.xlane.xlu0 %868
        %v871 = vperm.slane %v726, 0
        %872 = vset.pattern.permute.xlu0 0
        %873 = vperm.xlu0 %872, %v871
        %v874 = vpop.permute.xlu0 %873
        %v876 = vadd.f32 %v824, %v874
        %v877 = vadd.f32 %v827, %v874
        %v878 = vadd.f32 %v830, %v874
        %v879 = vadd.f32 %v833, %v874
        %v880 = vadd.f32 %v836, %v874
        %v881 = vadd.f32 %v839, %v874
        %v882 = vadd.f32 %v842, %v874
        %v883 = vadd.f32 %v845, %v874
        %v884 = vadd.f32 %v848, %v874
        %v885 = vadd.f32 %v851, %v874
        %v886 = vadd.f32 %v854, %v874
        %v887 = vadd.f32 %v857, %v874
        %v888 = vadd.f32 %v860, %v874
        %v889 = vadd.f32 %v863, %v874
        %v890 = vadd.f32 %v866, %v874
        %v891 = vadd.f32 %v869, %v874
        %vm892 = vcmp.gt.f32.partialorder %v616, 0.0
        %v893 = vsel %vm892, 1, 0
        %v894 = vcvt.s32.f32 %v893
        %v895 = vmul.f32 %v876, 1.442695
        %v896 = vpow.pop %v895
        %v897 = vmul.f32 %v877, 1.442695
        %v898 = vpow.pop %v897
        %v899 = vmul.f32 %v878, 1.442695
        %v900 = vpow.pop %v899
        %v901 = vmul.f32 %v879, 1.442695
        %v902 = vpow.pop %v901
        %v903 = vmul.f32 %v880, 1.442695
        %v904 = vpow.pop %v903
        %v905 = vmul.f32 %v881, 1.442695
        %v906 = vpow.pop %v905
        %v907 = vmul.f32 %v882, 1.442695
        %v908 = vpow.pop %v907
        %v909 = vmul.f32 %v883, 1.442695
        %v910 = vpow.pop %v909
        %v911 = vmul.f32 %v884, 1.442695
        %v912 = vpow.pop %v911
        %v913 = vmul.f32 %v885, 1.442695
        %v914 = vpow.pop %v913
        %v915 = vmul.f32 %v886, 1.442695
        %v916 = vpow.pop %v915
        %v917 = vmul.f32 %v887, 1.442695
        %v918 = vpow.pop %v917
        %v919 = vmul.f32 %v888, 1.442695
        %v920 = vpow.pop %v919
        %v921 = vmul.f32 %v889, 1.442695
        %v922 = vpow.pop %v921
        %v923 = vmul.f32 %v890, 1.442695
        %v924 = vpow.pop %v923
        %v925 = vmul.f32 %v891, 1.442695
        %v926 = vpow.pop %v925
        %v943 = vlaneseq
        %v944 = vand.u32 %v943, 127
        %v945 = vperm.slane %v896, %v944
        %v946 = vadd.s32 %v944, 4294967288
        %v947 = vperm.slane %v898, %v946
        %vm948 = vcmask 130112
        %v949 = vsel %vm948, %v947, %v945
        %v950 = vperm.slane %v900, %v944
        %v951 = vperm.slane %v902, %v946
        %v952 = vsel %vm948, %v951, %v950
        %v953 = vperm.slane %v904, %v944
        %v954 = vperm.slane %v906, %v946
        %v955 = vsel %vm948, %v954, %v953
        %v956 = vperm.slane %v908, %v944
        %v957 = vperm.slane %v910, %v946
        %v958 = vsel %vm948, %v957, %v956
        %v959 = vperm.slane %v912, %v944
        %v960 = vperm.slane %v914, %v946
        %v961 = vsel %vm948, %v960, %v959
        %v962 = vperm.slane %v916, %v944
        %v963 = vperm.slane %v918, %v946
        %v964 = vsel %vm948, %v963, %v962
        %v965 = vperm.slane %v920, %v944
        %v966 = vperm.slane %v922, %v946
        %v967 = vsel %vm948, %v966, %v965
        %v968 = vperm.slane %v924, %v944
        %v969 = vperm.slane %v926, %v946
        %v970 = vsel %vm948, %v969, %v968
        %vm971 = vcmask 1041409
        %v972 = vsel %vm971, %v952, %v949
        %vm973 = vcmask 1042434
        %v974 = vsel %vm973, %v955, %v972
        %vm975 = vcmask 1043459
        %v976 = vsel %vm975, %v958, %v974
        %vm977 = vcmask 1044484
        %v978 = vsel %vm977, %v961, %v976
        %vm979 = vcmask 1045509
        %v980 = vsel %vm979, %v964, %v978
        %vm981 = vcmask 1046534
        %v982 = vsel %vm981, %v967, %v980
        %vm983 = vcmask 1047559
        %v984 = vsel %vm983, %v970, %v982
        %v986 = vmul.f32 %v894, %v984
        %v987 = vsel %vm665, %v986, 0.0
        %988 = vadd.xlane.f32.xlu0 %v987
        %v989 = vpop.xlane.xlu0 %988
        %v990 = vadd.f32 %v989, 1e-05
        %v991 = vrcp.pop %v990
        %v992 = vmul.f32 %v990, %v991
        %v993 = vsub.f32 1.0, %v992
        %v994 = vmul.f32 %v991, %v993
        %v995 = vadd.f32 %v991, %v994
        %vm996 = vweird.f32 %v990
        %vm997 = vweird.f32 %v991
        %vm998 = vmor %vm996, %vm997
        %v999 = vsel %vm998, %v991, %v995
        %v1000 = vand.u32 2147483647, %v990
        %vm1001 = vcmp.eq.f32.partialorder %v1000, 8.507059e+37
        %v1002 = vand.u32 %v990, 2147483648
        %v1003 = vor.u32 1.1754944e-38, %v1002
        %v1004 = vsel %vm1001, %v1003, %v999
        %v1005 = vmul.f32 %v986, %v1004
        %v1006 = vpack.c.bf16 %v1005, %v1005
        %v1008 = vsel %vm665, %v1006, 0
        %1010 = vmatpush.bf16.msra.mxu0 0
        %1011 = vmatpush.bf16.msra.mxu0 0
        %1012 = vmatpush.bf16.msra.mxu0 0
        %1013 = vmatpush.bf16.msra.mxu0 0
        %1014 = vmatpush.bf16.msra.mxu0 0
        %1015 = vmatpush.bf16.msra.mxu0 0
        %1016 = vmatpush.bf16.msra.mxu0 0
        %1017 = vmatpush.bf16.msra.mxu0 %v663
        %1018 = vmatmul.bf16.gmra.mxu0 %v1008
        %v1019 = vpop.f32.mrf.mxu0
        %v1020 = vadd.f32 0.0, %v1019
        %v1021 = vpop.f32.mrf.mxu0
        %1022 = vdwg.mxu0
        %v1023 = vpack.c.bf16 %v681, %v681
        %v1025 = vsel %vm695, %v1023, 0
        %1027 = vmatpush.bf16.msra.mxu0 0
        %1028 = vmatpush.bf16.msra.mxu0 0
        %1029 = vmatpush.bf16.msra.mxu0 0
        %1030 = vmatpush.bf16.msra.mxu0 0
        %1031 = vmatpush.bf16.msra.mxu0 0
        %1032 = vmatpush.bf16.msra.mxu0 %v732
        %1033 = vmatpush.bf16.msra.mxu0 %v723
        %1034 = vmatpush.bf16.msra.mxu0 %v722
        %1035 = vmatmul.bf16.gmra.mxu0 %v1025
        %v1036 = vpop.f32.mrf.mxu0
        %v1037 = vadd.f32 0.0, %v1036
        %v1038 = vpop.f32.mrf.mxu0
        %1039 = vdwg.mxu0
        %v1041 = vrot.slane %v1037, 1
        %v1042 = vrot.slane %v1037, 2
        %v1043 = vrot.slane %v1037, 3
        %v1044 = vrot.slane %v1037, 4
        %v1045 = vrot.slane %v1037, 5
        %v1046 = vrot.slane %v1037, 6
        %v1047 = vrot.slane %v1037, 7
        %v1048 = vperm.slane %v1037, 0
        %v1049 = vperm.slane %v1041, 0
        %v1050 = vperm.slane %v1042, 0
        %v1051 = vperm.slane %v1043, 0
        %v1052 = vperm.slane %v1044, 0
        %v1053 = vperm.slane %v1045, 0
        %v1054 = vperm.slane %v1046, 0
        %v1055 = vperm.slane %v1047, 0
        %v1064 = vadd.f32 %v713, %v1048
        %v1065 = vadd.f32 %v715, %v1048
        %v1066 = vadd.f32 %v713, %v1049
        %v1067 = vadd.f32 %v715, %v1049
        %v1068 = vadd.f32 %v713, %v1050
        %v1069 = vadd.f32 %v715, %v1050
        %v1070 = vadd.f32 %v713, %v1051
        %v1071 = vadd.f32 %v715, %v1051
        %v1072 = vadd.f32 %v713, %v1052
        %v1073 = vadd.f32 %v715, %v1052
        %v1074 = vadd.f32 %v713, %v1053
        %v1075 = vadd.f32 %v715, %v1053
        %v1076 = vadd.f32 %v713, %v1054
        %v1077 = vadd.f32 %v715, %v1054
        %v1078 = vadd.f32 %v713, %v1055
        %v1079 = vadd.f32 %v715, %v1055
        %v1080 = vtanh.pop %v1064
        %v1081 = vtanh.pop %v1065
        %v1082 = vtanh.pop %v1066
        %v1083 = vtanh.pop %v1067
        %v1084 = vtanh.pop %v1068
        %v1085 = vtanh.pop %v1069
        %v1086 = vtanh.pop %v1070
        %v1087 = vtanh.pop %v1071
        %v1088 = vtanh.pop %v1072
        %v1089 = vtanh.pop %v1073
        %v1090 = vtanh.pop %v1074
        %v1091 = vtanh.pop %v1075
        %v1092 = vtanh.pop %v1076
        %v1093 = vtanh.pop %v1077
        %v1094 = vtanh.pop %v1078
        %v1095 = vtanh.pop %v1079
        %v1096 = vmul.f32 %v1080, %v804
        %v1097 = vmul.f32 %v1081, %v804
        %v1098 = vmul.f32 %v1082, %v804
        %v1099 = vmul.f32 %v1083, %v804
        %v1100 = vmul.f32 %v1084, %v804
        %v1101 = vmul.f32 %v1085, %v804
        %v1102 = vmul.f32 %v1086, %v804
        %v1103 = vmul.f32 %v1087, %v804
        %v1104 = vmul.f32 %v1088, %v804
        %v1105 = vmul.f32 %v1089, %v804
        %v1106 = vmul.f32 %v1090, %v804
        %v1107 = vmul.f32 %v1091, %v804
        %v1108 = vmul.f32 %v1092, %v804
        %v1109 = vmul.f32 %v1093, %v804
        %v1110 = vmul.f32 %v1094, %v804
        %v1111 = vmul.f32 %v1095, %v804
        %v1112 = vsel %vm695, %v1096, 0.0
        %1113 = vadd.xlane.f32.xlu0 %v1112
        %v1114 = vpop.xlane.xlu0 %1113
        %v1115 = vsel %vm695, %v1097, 0.0
        %1116 = vadd.xlane.f32.xlu0 %v1115
        %v1117 = vpop.xlane.xlu0 %1116
        %v1118 = vsel %vm695, %v1098, 0.0
        %1119 = vadd.xlane.f32.xlu0 %v1118
        %v1120 = vpop.xlane.xlu0 %1119
        %v1121 = vsel %vm695, %v1099, 0.0
        %1122 = vadd.xlane.f32.xlu0 %v1121
        %v1123 = vpop.xlane.xlu0 %1122
        %v1124 = vsel %vm695, %v1100, 0.0
        %1125 = vadd.xlane.f32.xlu0 %v1124
        %v1126 = vpop.xlane.xlu0 %1125
        %v1127 = vsel %vm695, %v1101, 0.0
        %1128 = vadd.xlane.f32.xlu0 %v1127
        %v1129 = vpop.xlane.xlu0 %1128
        %v1130 = vsel %vm695, %v1102, 0.0
        %1131 = vadd.xlane.f32.xlu0 %v1130
        %v1132 = vpop.xlane.xlu0 %1131
        %v1133 = vsel %vm695, %v1103, 0.0
        %1134 = vadd.xlane.f32.xlu0 %v1133
        %v1135 = vpop.xlane.xlu0 %1134
        %v1136 = vsel %vm695, %v1104, 0.0
        %1137 = vadd.xlane.f32.xlu0 %v1136
        %v1138 = vpop.xlane.xlu0 %1137
        %v1139 = vsel %vm695, %v1105, 0.0
        %1140 = vadd.xlane.f32.xlu0 %v1139
        %v1141 = vpop.xlane.xlu0 %1140
        %v1142 = vsel %vm695, %v1106, 0.0
        %1143 = vadd.xlane.f32.xlu0 %v1142
        %v1144 = vpop.xlane.xlu0 %1143
        %v1145 = vsel %vm695, %v1107, 0.0
        %1146 = vadd.xlane.f32.xlu0 %v1145
        %v1147 = vpop.xlane.xlu0 %1146
        %v1148 = vsel %vm695, %v1108, 0.0
        %1149 = vadd.xlane.f32.xlu0 %v1148
        %v1150 = vpop.xlane.xlu0 %1149
        %v1151 = vsel %vm695, %v1109, 0.0
        %1152 = vadd.xlane.f32.xlu0 %v1151
        %v1153 = vpop.xlane.xlu0 %1152
        %v1154 = vsel %vm695, %v1110, 0.0
        %1155 = vadd.xlane.f32.xlu0 %v1154
        %v1156 = vpop.xlane.xlu0 %1155
        %v1157 = vsel %vm695, %v1111, 0.0
        %1158 = vadd.xlane.f32.xlu0 %v1157
        %v1159 = vpop.xlane.xlu0 %1158
        %v1160 = vadd.f32 %v1114, %v874
        %v1161 = vadd.f32 %v1117, %v874
        %v1162 = vadd.f32 %v1120, %v874
        %v1163 = vadd.f32 %v1123, %v874
        %v1164 = vadd.f32 %v1126, %v874
        %v1165 = vadd.f32 %v1129, %v874
        %v1166 = vadd.f32 %v1132, %v874
        %v1167 = vadd.f32 %v1135, %v874
        %v1168 = vadd.f32 %v1138, %v874
        %v1169 = vadd.f32 %v1141, %v874
        %v1170 = vadd.f32 %v1144, %v874
        %v1171 = vadd.f32 %v1147, %v874
        %v1172 = vadd.f32 %v1150, %v874
        %v1173 = vadd.f32 %v1153, %v874
        %v1174 = vadd.f32 %v1156, %v874
        %v1175 = vadd.f32 %v1159, %v874
        %vm1176 = vcmp.gt.f32.partialorder %v615, 0.0
        %v1177 = vsel %vm1176, 1, 0
        %v1178 = vcvt.s32.f32 %v1177
        %v1179 = vmul.f32 %v1160, 1.442695
        %v1180 = vpow.pop %v1179
        %v1181 = vmul.f32 %v1161, 1.442695
        %v1182 = vpow.pop %v1181
        %v1183 = vmul.f32 %v1162, 1.442695
        %v1184 = vpow.pop %v1183
        %v1185 = vmul.f32 %v1163, 1.442695
        %v1186 = vpow.pop %v1185
        %v1187 = vmul.f32 %v1164, 1.442695
        %v1188 = vpow.pop %v1187
        %v1189 = vmul.f32 %v1165, 1.442695
        %v1190 = vpow.pop %v1189
        %v1191 = vmul.f32 %v1166, 1.442695
        %v1192 = vpow.pop %v1191
        %v1193 = vmul.f32 %v1167, 1.442695
        %v1194 = vpow.pop %v1193
        %v1195 = vmul.f32 %v1168, 1.442695
        %v1196 = vpow.pop %v1195
        %v1197 = vmul.f32 %v1169, 1.442695
        %v1198 = vpow.pop %v1197
        %v1199 = vmul.f32 %v1170, 1.442695
        %v1200 = vpow.pop %v1199
        %v1201 = vmul.f32 %v1171, 1.442695
        %v1202 = vpow.pop %v1201
        %v1203 = vmul.f32 %v1172, 1.442695
        %v1204 = vpow.pop %v1203
        %v1205 = vmul.f32 %v1173, 1.442695
        %v1206 = vpow.pop %v1205
        %v1207 = vmul.f32 %v1174, 1.442695
        %v1208 = vpow.pop %v1207
        %v1209 = vmul.f32 %v1175, 1.442695
        %v1210 = vpow.pop %v1209
        %v1227 = vperm.slane %v1180, %v944
        %v1228 = vperm.slane %v1182, %v946
        %v1229 = vsel %vm948, %v1228, %v1227
        %v1230 = vperm.slane %v1184, %v944
        %v1231 = vperm.slane %v1186, %v946
        %v1232 = vsel %vm948, %v1231, %v1230
        %v1233 = vperm.slane %v1188, %v944
        %v1234 = vperm.slane %v1190, %v946
        %v1235 = vsel %vm948, %v1234, %v1233
        %v1236 = vperm.slane %v1192, %v944
        %v1237 = vperm.slane %v1194, %v946
        %v1238 = vsel %vm948, %v1237, %v1236
        %v1239 = vperm.slane %v1196, %v944
        %v1240 = vperm.slane %v1198, %v946
        %v1241 = vsel %vm948, %v1240, %v1239
        %v1242 = vperm.slane %v1200, %v944
        %v1243 = vperm.slane %v1202, %v946
        %v1244 = vsel %vm948, %v1243, %v1242
        %v1245 = vperm.slane %v1204, %v944
        %v1246 = vperm.slane %v1206, %v946
        %v1247 = vsel %vm948, %v1246, %v1245
        %v1248 = vperm.slane %v1208, %v944
        %v1249 = vperm.slane %v1210, %v946
        %v1250 = vsel %vm948, %v1249, %v1248
        %v1251 = vsel %vm971, %v1232, %v1229
        %v1252 = vsel %vm973, %v1235, %v1251
        %v1253 = vsel %vm975, %v1238, %v1252
        %v1254 = vsel %vm977, %v1241, %v1253
        %v1255 = vsel %vm979, %v1244, %v1254
        %v1256 = vsel %vm981, %v1247, %v1255
        %v1257 = vsel %vm983, %v1250, %v1256
        %v1259 = vmul.f32 %v1178, %v1257
        %v1260 = vsel %vm665, %v1259, 0.0
        %1261 = vadd.xlane.f32.xlu0 %v1260
        %v1262 = vpop.xlane.xlu0 %1261
        %v1263 = vadd.f32 %v1262, 1e-05
        %v1264 = vrcp.pop %v1263
        %v1265 = vmul.f32 %v1263, %v1264
        %v1266 = vsub.f32 1.0, %v1265
        %v1267 = vmul.f32 %v1264, %v1266
        %v1268 = vadd.f32 %v1264, %v1267
        %vm1269 = vweird.f32 %v1263
        %vm1270 = vweird.f32 %v1264
        %vm1271 = vmor %vm1269, %vm1270
        %v1272 = vsel %vm1271, %v1264, %v1268
        %v1273 = vand.u32 2147483647, %v1263
        %vm1274 = vcmp.eq.f32.partialorder %v1273, 8.507059e+37
        %v1275 = vand.u32 %v1263, 2147483648
        %v1276 = vor.u32 1.1754944e-38, %v1275
        %v1277 = vsel %vm1274, %v1276, %v1272
        %v1278 = vmul.f32 %v1259, %v1277
        %v1279 = vpack.c.bf16 %v1278, %v1278
        %v1281 = vsel %vm665, %v1279, 0
        %1283 = vmatpush.bf16.msra.mxu0 0
        %1284 = vmatpush.bf16.msra.mxu0 0
        %1285 = vmatpush.bf16.msra.mxu0 0
        %1286 = vmatpush.bf16.msra.mxu0 0
        %1287 = vmatpush.bf16.msra.mxu0 0
        %1288 = vmatpush.bf16.msra.mxu0 0
        %1289 = vmatpush.bf16.msra.mxu0 0
        %1290 = vmatpush.bf16.msra.mxu0 %v663
        %1291 = vmatmul.bf16.gmra.mxu0 %v1281
        %v1292 = vpop.f32.mrf.mxu0
        %v1293 = vadd.f32 0.0, %v1292
        %v1294 = vpop.f32.mrf.mxu0
        %1295 = vdwg.mxu0
        %v1296 = vld [vmem:[%s605] sm:$0xff]
        %1298 = vrot.lane.b32.xlu0 %v1296, 40
        %v1299 = vpop.permute.xlu0 %1298
        %v1301 = vsel %vm695, %v1293, %v1299
        %v1302 = vld [vmem:[%s609] sm:$0xff]
        %1304 = vrot.lane.b32.xlu0 %v1302, 40
        %v1305 = vpop.permute.xlu0 %1304
        %v1307 = vsel %vm695, %v1020, %v1305
        %v1308 = vpack.c.bf16 %v1301, %v1301
        %v1309 = vld [vmem:[%s13] sm:$0xff]
        %v1310 = vld [vmem:[%s13 + $0x8] sm:$0xff]
        %v1311 = vld [vmem:[%s13 + $0x10] sm:$0xff]
        %v1312 = vld [vmem:[%s13 + $0x18] sm:$0xff]
        %v1313 = vld [vmem:[%s13 + $0x20] sm:$0xff]
        %v1314 = vld [vmem:[%s13 + $0x28] sm:$0xff]
        %v1315 = vld [vmem:[%s13 + $0x30] sm:$0xff]
        %v1316 = vld [vmem:[%s13 + $0x38] sm:$0xff]
        %v1317 = vld [vmem:[%s13 + $0x40] sm:$0xff]
        %v1318 = vld [vmem:[%s13 + $0x48] sm:$0xff]
        %v1319 = vld [vmem:[%s13 + $0x50] sm:$0xff]
        %v1320 = vld [vmem:[%s13 + $0x58] sm:$0xff]
        %v1321 = vld [vmem:[%s13 + $0x60] sm:$0xff]
        %v1322 = vld [vmem:[%s13 + $0x68] sm:$0xff]
        %v1323 = vld [vmem:[%s13 + $0x70] sm:$0xff]
        %v1324 = vld [vmem:[%s13 + $0x78] sm:$0xff]
        %v1325 = vld [vmem:[%s13 + $0x80] sm:$0xff]
        %v1326 = vld [vmem:[%s13 + $0x88] sm:$0xff]
        %v1327 = vld [vmem:[%s13 + $0x90] sm:$0xff]
        %v1328 = vld [vmem:[%s13 + $0x98] sm:$0xff]
        %v1329 = vld [vmem:[%s13 + $0xa0] sm:$0xff]
        %v1330 = vld [vmem:[%s13 + $0xa8] sm:$0xff]
        %v1331 = vld [vmem:[%s13 + $0xb0] sm:$0xff]
        %v1332 = vld [vmem:[%s13 + $0xb8] sm:$0xff]
        %v1333 = vld [vmem:[%s13 + $0xc0] sm:$0xff]
        %v1334 = vld [vmem:[%s13 + $0xc8] sm:$0xff]
        %v1335 = vld [vmem:[%s13 + $0xd0] sm:$0xff]
        %v1336 = vld [vmem:[%s13 + $0xd8] sm:$0xff]
        %v1337 = vld [vmem:[%s13 + $0xe0] sm:$0xff]
        %v1338 = vld [vmem:[%s13 + $0xe8] sm:$0xff]
        %v1339 = vpack.c.bf16 %v1314, %v1309
        %v1340 = vpack.c.bf16 %v1315, %v1310
        %v1341 = vpack.c.bf16 %v1316, %v1311
        %v1342 = vpack.c.bf16 %v1317, %v1312
        %v1343 = vpack.c.bf16 %v1318, %v1313
        %v1344 = vpack.c.bf16 %v1324, %v1319
        %v1345 = vpack.c.bf16 %v1325, %v1320
        %v1346 = vpack.c.bf16 %v1326, %v1321
        %v1347 = vpack.c.bf16 %v1327, %v1322
        %v1348 = vpack.c.bf16 %v1328, %v1323
        %v1349 = vpack.c.bf16 %v1334, %v1329
        %v1350 = vpack.c.bf16 %v1335, %v1330
        %v1351 = vpack.c.bf16 %v1336, %v1331
        %v1352 = vpack.c.bf16 %v1337, %v1332
        %v1353 = vpack.c.bf16 %v1338, %v1333
        %vm1354 = vcmask 392192
        %v1356 = vsel %vm1354, %v1308, 0
        %1358 = vmatpush.bf16.msra.mxu0 0
        %1359 = vmatpush.bf16.msra.mxu0 0
        %1360 = vmatpush.bf16.msra.mxu0 0
        %1361 = vmatpush.bf16.msra.mxu0 0
        %1362 = vmatpush.bf16.msra.mxu0 0
        %1363 = vmatpush.bf16.msra.mxu0 %v1349
        %1364 = vmatpush.bf16.msra.mxu0 %v1344
        %1365 = vmatpush.bf16.msra.mxu0 %v1339
        %1366 = vmatmul.bf16.gmra.mxu0 %v1356
        %v1367 = vpop.f32.mrf.mxu0
        %v1368 = vadd.f32 0.0, %v1367
        %v1369 = vpop.f32.mrf.mxu0
        %1370 = vdwg.mxu0
        %1371 = vmatpush.bf16.msra.mxu0 0
        %1372 = vmatpush.bf16.msra.mxu0 0
        %1373 = vmatpush.bf16.msra.mxu0 0
        %1374 = vmatpush.bf16.msra.mxu0 0
        %1375 = vmatpush.bf16.msra.mxu0 0
        %1376 = vmatpush.bf16.msra.mxu0 %v1350
        %1377 = vmatpush.bf16.msra.mxu0 %v1345
        %1378 = vmatpush.bf16.msra.mxu0 %v1340
        %1379 = vmatmul.bf16.gmra.mxu0 %v1356
        %v1380 = vpop.f32.mrf.mxu0
        %v1381 = vadd.f32 0.0, %v1380
        %v1382 = vpop.f32.mrf.mxu0
        %1383 = vdwg.mxu0
        %1384 = vmatpush.bf16.msra.mxu0 0
        %1385 = vmatpush.bf16.msra.mxu0 0
        %1386 = vmatpush.bf16.msra.mxu0 0
        %1387 = vmatpush.bf16.msra.mxu0 0
        %1388 = vmatpush.bf16.msra.mxu0 0
        %1389 = vmatpush.bf16.msra.mxu0 %v1351
        %1390 = vmatpush.bf16.msra.mxu0 %v1346
        %1391 = vmatpush.bf16.msra.mxu0 %v1341
        %1392 = vmatmul.bf16.gmra.mxu0 %v1356
        %v1393 = vpop.f32.mrf.mxu0
        %v1394 = vadd.f32 0.0, %v1393
        %v1395 = vpop.f32.mrf.mxu0
        %1396 = vdwg.mxu0
        %1397 = vmatpush.bf16.msra.mxu0 0
        %1398 = vmatpush.bf16.msra.mxu0 0
        %1399 = vmatpush.bf16.msra.mxu0 0
        %1400 = vmatpush.bf16.msra.mxu0 0
        %1401 = vmatpush.bf16.msra.mxu0 0
        %1402 = vmatpush.bf16.msra.mxu0 %v1352
        %1403 = vmatpush.bf16.msra.mxu0 %v1347
        %1404 = vmatpush.bf16.msra.mxu0 %v1342
        %1405 = vmatmul.bf16.gmra.mxu0 %v1356
        %v1406 = vpop.f32.mrf.mxu0
        %v1407 = vadd.f32 0.0, %v1406
        %v1408 = vpop.f32.mrf.mxu0
        %1409 = vdwg.mxu0
        %1410 = vmatpush.bf16.msra.mxu0 0
        %1411 = vmatpush.bf16.msra.mxu0 0
        %1412 = vmatpush.bf16.msra.mxu0 0
        %1413 = vmatpush.bf16.msra.mxu0 0
        %1414 = vmatpush.bf16.msra.mxu0 0
        %1415 = vmatpush.bf16.msra.mxu0 %v1353
        %1416 = vmatpush.bf16.msra.mxu0 %v1348
        %1417 = vmatpush.bf16.msra.mxu0 %v1343
        %1418 = vmatmul.bf16.gmra.mxu0 %v1356
        %v1419 = vpop.f32.mrf.mxu0
        %v1420 = vadd.f32 0.0, %v1419
        %v1421 = vpop.f32.mrf.mxu0
        %1422 = vdwg.mxu0
        %1424 = vrot.lane.b32.xlu0 %v1307, 48
        %v1425 = vpop.permute.xlu0 %1424
        %1427 = vrot.lane.b32.xlu0 %v1307, 96
        %v1428 = vpop.permute.xlu0 %1427
        %1430 = vrot.lane.b32.xlu0 %v1307, 16
        %v1431 = vpop.permute.xlu0 %1430
        %1433 = vrot.lane.b32.xlu0 %v1307, 64
        %v1434 = vpop.permute.xlu0 %1433
        %1436 = vrot.lane.b32.xlu0 %v1307, 112
        %v1437 = vpop.permute.xlu0 %1436
        %1439 = vrot.lane.b32.xlu0 %v1307, 32
        %v1440 = vpop.permute.xlu0 %1439
        %1442 = vrot.lane.b32.xlu0 %v1307, 80
        %v1443 = vpop.permute.xlu0 %1442
        %v1445 = vsel %vm1354, %v1307, %v1425
        %vm1446 = vcmask 785408
        %v1447 = vsel %vm1446, %v1445, %v1428
        %v1448 = vsel %vm665, %v1428, %v1431
        %v1449 = vsel %vm634, %v1448, %v1434
        %vm1450 = vcmask 916480
        %v1451 = vsel %vm1450, %v1449, %v1437
        %v1452 = vsel %vm660, %v1437, %v1440
        %vm1453 = vcmask 654336
        %v1454 = vsel %vm1453, %v1452, %v1443
        %v1455 = vmul.f32 %v1368, %v1447
        %v1456 = vmul.f32 %v1381, %v1451
        %v1457 = vmul.f32 %v1394, %v1454
        %v1458 = vmul.f32 %v1407, %v1447
        %v1459 = vmul.f32 %v1420, %v1448
        %v1460 = vld [vmem:[%s14] sm:$0xff]
        %v1461 = vld [vmem:[%s14 + $0x8] sm:$0xff]
        %v1462 = vld [vmem:[%s14 + $0x10] sm:$0xff]
        %v1463 = vld [vmem:[%s14 + $0x18] sm:$0xff]
        %v1464 = vld [vmem:[%s14 + $0x20] sm:$0xff]
        %v1465 = vld [vmem:[%s14 + $0x28] sm:$0xff]
        %v1466 = vld [vmem:[%s14 + $0x30] sm:$0xff]
        %v1467 = vld [vmem:[%s14 + $0x38] sm:$0xff]
        %v1468 = vld [vmem:[%s14 + $0x40] sm:$0xff]
        %v1469 = vld [vmem:[%s14 + $0x48] sm:$0xff]
        %v1470 = vld [vmem:[%s14 + $0x50] sm:$0xff]
        %v1471 = vld [vmem:[%s14 + $0x58] sm:$0xff]
        %v1472 = vld [vmem:[%s14 + $0x60] sm:$0xff]
        %v1473 = vld [vmem:[%s14 + $0x68] sm:$0xff]
        %v1474 = vld [vmem:[%s14 + $0x70] sm:$0xff]
        %v1475 = vld [vmem:[%s14 + $0x78] sm:$0xff]
        %v1476 = vld [vmem:[%s14 + $0x80] sm:$0xff]
        %v1477 = vld [vmem:[%s14 + $0x88] sm:$0xff]
        %v1478 = vld [vmem:[%s14 + $0x90] sm:$0xff]
        %v1479 = vld [vmem:[%s14 + $0x98] sm:$0xff]
        %v1480 = vld [vmem:[%s14 + $0xa0] sm:$0xff]
        %v1481 = vld [vmem:[%s14 + $0xa8] sm:$0xff]
        %v1482 = vld [vmem:[%s14 + $0xb0] sm:$0xff]
        %v1483 = vld [vmem:[%s14 + $0xb8] sm:$0xff]
        %v1484 = vld [vmem:[%s14 + $0xc0] sm:$0xff]
        %v1485 = vld [vmem:[%s14 + $0xc8] sm:$0xff]
        %v1486 = vld [vmem:[%s14 + $0xd0] sm:$0xff]
        %v1487 = vld [vmem:[%s14 + $0xd8] sm:$0xff]
        %v1488 = vld [vmem:[%s14 + $0xe0] sm:$0xff]
        %v1489 = vld [vmem:[%s14 + $0xe8] sm:$0xff]
        %v1490 = vld [vmem:[%s14 + $0xf0] sm:$0xff]
        %v1491 = vld [vmem:[%s14 + $0xf8] sm:$0xff]
        %v1492 = vld [vmem:[%s14 + $0x100] sm:$0xff]
        %v1493 = vld [vmem:[%s14 + $0x108] sm:$0xff]
        %v1494 = vld [vmem:[%s14 + $0x110] sm:$0xff]
        %v1495 = vld [vmem:[%s14 + $0x118] sm:$0xff]
        %v1496 = vld [vmem:[%s14 + $0x120] sm:$0xff]
        %v1497 = vld [vmem:[%s14 + $0x128] sm:$0xff]
        %v1498 = vld [vmem:[%s14 + $0x130] sm:$0xff]
        %v1499 = vld [vmem:[%s14 + $0x138] sm:$0xff]
        %v1500 = vld [vmem:[%s14 + $0x140] sm:$0xff]
        %v1501 = vld [vmem:[%s14 + $0x148] sm:$0xff]
        %v1502 = vld [vmem:[%s14 + $0x150] sm:$0xff]
        %v1503 = vld [vmem:[%s14 + $0x158] sm:$0xff]
        %v1504 = vld [vmem:[%s14 + $0x160] sm:$0xff]
        %v1505 = vld [vmem:[%s14 + $0x168] sm:$0xff]
        %v1506 = vld [vmem:[%s14 + $0x170] sm:$0xff]
        %v1507 = vld [vmem:[%s14 + $0x178] sm:$0xff]
        %v1508 = vld [vmem:[%s14 + $0x180] sm:$0xff]
        %v1509 = vld [vmem:[%s14 + $0x188] sm:$0xff]
        %v1510 = vld [vmem:[%s14 + $0x190] sm:$0xff]
        %v1511 = vld [vmem:[%s14 + $0x198] sm:$0xff]
        %v1512 = vld [vmem:[%s14 + $0x1a0] sm:$0xff]
        %v1513 = vld [vmem:[%s14 + $0x1a8] sm:$0xff]
        %v1514 = vld [vmem:[%s14 + $0x1b0] sm:$0xff]
        %v1515 = vld [vmem:[%s14 + $0x1b8] sm:$0xff]
        %v1516 = vld [vmem:[%s14 + $0x1c0] sm:$0xff]
        %v1517 = vld [vmem:[%s14 + $0x1c8] sm:$0xff]
        %v1518 = vld [vmem:[%s14 + $0x1d0] sm:$0xff]
        %v1519 = vld [vmem:[%s14 + $0x1d8] sm:$0xff]
        %v1520 = vld [vmem:[%s14 + $0x1e0] sm:$0xff]
        %v1521 = vld [vmem:[%s14 + $0x1e8] sm:$0xff]
        %v1522 = vld [vmem:[%s14 + $0x1f0] sm:$0xff]
        %v1523 = vld [vmem:[%s14 + $0x1f8] sm:$0xff]
        %v1524 = vld [vmem:[%s14 + $0x200] sm:$0xff]
        %v1525 = vld [vmem:[%s14 + $0x208] sm:$0xff]
        %v1526 = vld [vmem:[%s14 + $0x210] sm:$0xff]
        %v1527 = vld [vmem:[%s14 + $0x218] sm:$0xff]
        %v1528 = vld [vmem:[%s14 + $0x220] sm:$0xff]
        %v1529 = vld [vmem:[%s14 + $0x228] sm:$0xff]
        %v1530 = vld [vmem:[%s14 + $0x230] sm:$0xff]
        %v1531 = vld [vmem:[%s14 + $0x238] sm:$0xff]
        %v1532 = vld [vmem:[%s15] sm:$0x1]
        %v1534 = vperm.slane %v1532, 0
        %v1537 = vsel %vm634, %v1459, 0
        %1539 = vmatpush.msra.mxu0 %v1475
        %1540 = vmatpush.msra.mxu0 %v1474
        %1541 = vmatpush.msra.mxu0 %v1473
        %1542 = vmatpush.msra.mxu0 %v1472
        %1543 = vmatpush.msra.mxu0 %v1471
        %1544 = vmatpush.msra.mxu0 %v1470
        %1545 = vmatpush.msra.mxu0 %v1469
        %1546 = vmatpush.msra.mxu0 %v1468
        %1547 = vmatpush.msra.mxu0 %v1467
        %1548 = vmatpush.msra.mxu0 %v1466
        %1549 = vmatpush.msra.mxu0 %v1465
        %1550 = vmatpush.msra.mxu0 %v1464
        %1551 = vmatpush.msra.mxu0 %v1463
        %1552 = vmatpush.msra.mxu0 %v1462
        %1553 = vmatpush.msra.mxu0 %v1461
        %1554 = vmatpush.msra.mxu0 %v1460
        %1555 = vmatmul.f32.gmra.mxu0 %v1455
        %v1556 = vpop.f32.mrf.mxu0
        %v1557 = vadd.f32 %v1534, %v1556
        %1558 = vdwg.mxu0
        %1559 = vmatpush.msra.mxu0 %v1491
        %1560 = vmatpush.msra.mxu0 %v1490
        %1561 = vmatpush.msra.mxu0 %v1489
        %1562 = vmatpush.msra.mxu0 %v1488
        %1563 = vmatpush.msra.mxu0 %v1487
        %1564 = vmatpush.msra.mxu0 %v1486
        %1565 = vmatpush.msra.mxu0 %v1485
        %1566 = vmatpush.msra.mxu0 %v1484
        %1567 = vmatpush.msra.mxu0 %v1483
        %1568 = vmatpush.msra.mxu0 %v1482
        %1569 = vmatpush.msra.mxu0 %v1481
        %1570 = vmatpush.msra.mxu0 %v1480
        %1571 = vmatpush.msra.mxu0 %v1479
        %1572 = vmatpush.msra.mxu0 %v1478
        %1573 = vmatpush.msra.mxu0 %v1477
        %1574 = vmatpush.msra.mxu0 %v1476
        %1575 = vmatmul.f32.gmra.mxu0 %v1456
        %v1576 = vpop.f32.mrf.mxu0
        %v1577 = vadd.f32 %v1557, %v1576
        %1578 = vdwg.mxu0
        %1579 = vmatpush.msra.mxu0 %v1507
        %1580 = vmatpush.msra.mxu0 %v1506
        %1581 = vmatpush.msra.mxu0 %v1505
        %1582 = vmatpush.msra.mxu0 %v1504
        %1583 = vmatpush.msra.mxu0 %v1503
        %1584 = vmatpush.msra.mxu0 %v1502
        %1585 = vmatpush.msra.mxu0 %v1501
        %1586 = vmatpush.msra.mxu0 %v1500
        %1587 = vmatpush.msra.mxu0 %v1499
        %1588 = vmatpush.msra.mxu0 %v1498
        %1589 = vmatpush.msra.mxu0 %v1497
        %1590 = vmatpush.msra.mxu0 %v1496
        %1591 = vmatpush.msra.mxu0 %v1495
        %1592 = vmatpush.msra.mxu0 %v1494
        %1593 = vmatpush.msra.mxu0 %v1493
        %1594 = vmatpush.msra.mxu0 %v1492
        %1595 = vmatmul.f32.gmra.mxu0 %v1457
        %v1596 = vpop.f32.mrf.mxu0
        %v1597 = vadd.f32 %v1577, %v1596
        %1598 = vdwg.mxu0
        %1599 = vmatpush.msra.mxu0 %v1523
        %1600 = vmatpush.msra.mxu0 %v1522
        %1601 = vmatpush.msra.mxu0 %v1521
        %1602 = vmatpush.msra.mxu0 %v1520
        %1603 = vmatpush.msra.mxu0 %v1519
        %1604 = vmatpush.msra.mxu0 %v1518
        %1605 = vmatpush.msra.mxu0 %v1517
        %1606 = vmatpush.msra.mxu0 %v1516
        %1607 = vmatpush.msra.mxu0 %v1515
        %1608 = vmatpush.msra.mxu0 %v1514
        %1609 = vmatpush.msra.mxu0 %v1513
        %1610 = vmatpush.msra.mxu0 %v1512
        %1611 = vmatpush.msra.mxu0 %v1511
        %1612 = vmatpush.msra.mxu0 %v1510
        %1613 = vmatpush.msra.mxu0 %v1509
        %1614 = vmatpush.msra.mxu0 %v1508
        %1615 = vmatmul.f32.gmra.mxu0 %v1458
        %v1616 = vpop.f32.mrf.mxu0
        %v1617 = vadd.f32 %v1597, %v1616
        %1618 = vdwg.mxu0
        %1619 = vmatpush.msra.mxu0 0.0
        %1620 = vmatpush.msra.mxu0 0.0
        %1621 = vmatpush.msra.mxu0 0.0
        %1622 = vmatpush.msra.mxu0 0.0
        %1623 = vmatpush.msra.mxu0 0.0
        %1624 = vmatpush.msra.mxu0 0.0
        %1625 = vmatpush.msra.mxu0 0.0
        %1626 = vmatpush.msra.mxu0 0.0
        %1627 = vmatpush.msra.mxu0 %v1531
        %1628 = vmatpush.msra.mxu0 %v1530
        %1629 = vmatpush.msra.mxu0 %v1529
        %1630 = vmatpush.msra.mxu0 %v1528
        %1631 = vmatpush.msra.mxu0 %v1527
        %1632 = vmatpush.msra.mxu0 %v1526
        %1633 = vmatpush.msra.mxu0 %v1525
        %1634 = vmatpush.msra.mxu0 %v1524
        %1635 = vmatmul.f32.gmra.mxu0 %v1537
        %v1636 = vpop.f32.mrf.mxu0
        %v1637 = vadd.f32 %v1617, %v1636
        %1638 = vdwg.mxu0
        %vm1639 = vcmask 97280
        %1640 = vst.msk [vmem:[%s583] sm:$0xff] %vm1639, %v1637
        %s1641 = sand.u32 %s406, 1
        %s1642 = scalar_lea.sflag [#allocation4], %s1641
        %s1643 = sand.u32 %s406, 1
        %s1644 = smul.addr %s1643, 8
        %s1645 = scalar_lea.vmem [#allocation3], %s1644
        // Predicated region
        $region85: #{tpu_custom_call.1} parent=83 // pred_check
          %p1646 = pneg %p416
        $region86: #{tpu_custom_call.1} parent=83 // pred_check_branch
          %1648 = sbr.rel (%p1646) target = $region88
        $region87: #{tpu_custom_call.1} parent=83 // pred_region
          %1650 = vsyncadd %s1642, 0
          %s1651 = smul.addr %s32, 8
          %s1652 = scalar_lea.hbm %s16, %s1651
          %s1654 = sshll.u32 %s1645, 4
          %s1655 = int_to_ptr.vmem [resolvable:$true] %s1654
          %s1656 = sshll.u32 %s1652, 4
          %s1657 = int_to_ptr.hbm [resolvable:$true] %s1656
          %1659 = dma.vmem_to_hbm [thread:$0]  %s1655, 128, %s1657, %s1642
        $region88: #{tpu_custom_call.1} parent=83 // pred_fallthru
          _
      $region84: #{tpu_custom_call.1} parent=5 // pred_fallthru
        _
      %p1660 = scmp.le.s32.totalorder 2, %s27
      // Predicated region
      $region89: #{tpu_custom_call.1} parent=5 // pred_check
        %p1661 = pneg %p1660
      $region90: #{tpu_custom_call.1} parent=5 // pred_check_branch
        %1663 = sbr.rel (%p1661) target = $region92
      $region91: #{tpu_custom_call.1} parent=5 // pred_region
        %s1664 = ssub.s32 %s27, 2
        // Predicated region
        $region93: #{tpu_custom_call.1} parent=91 // pred_check
          %p1665 = pneg %p422
        $region94: #{tpu_custom_call.1} parent=91 // pred_check_branch
          %1667 = sbr.rel (%p1665) target = $region96
        $region95: #{tpu_custom_call.1} parent=91 // pred_region
          %s1668 = sand.u32 %s407, 1
          %s1669 = scalar_lea.sflag [#allocation4], %s1668
          %s1670 = sand.u32 %s407, 1
          %s1671 = smul.addr %s1670, 8
          %s1672 = scalar_lea.vmem [#allocation3], %s1671
          %1674 = dma.done %s1669, 128
        $region96: #{tpu_custom_call.1} parent=91 // pred_fallthru
          _
      $region92: #{tpu_custom_call.1} parent=5 // pred_fallthru
        _
    $region6: #{tpu_custom_call.1} parent=1 // loop_footer
      %s31 = sadd.s32 1, %s27
    $region7: #{tpu_custom_call.1} parent=1 // loop_footer_branch
      %26 = sbr.rel target = $region3
    $region8: #{tpu_custom_call.1} parent=1 // loop_exit
      _
    %1675 = vsyncpa [#allocation4], 1
    %s1676 = scalar_lea.sflag [#allocation4], 1
    %1677 = vsyncpa %s1676, 1

</llo_original>
